<compile_context>
chip_gen: v5e
topology: v5e:2x2
jax: 0.10.0
libtpu: 0.0.40
codegen_flags: <defaults>
</compile_context>

<pallas_src>
import functools

import jax
import jax.numpy as jnp
from jax.experimental import pallas as pl
from jax.experimental.pallas import tpu as pltpu

PARAM_ORDER = (
    "w1_0", "b1_0", "w2_0", "b2_0",   # GraphConvolution 0
    "w1_1", "b1_1", "w2_1", "b2_1",   # GraphConvolution 1
    "ws", "bs", "wt", "bt",           # GraphAggregation (sigmoid / tanh branches)
    "wl", "bl",                       # linear_layer (Linear + Tanh)
    "wo", "bo",                       # output_layer
)

FUSED_ORDER = (
    "w0", "b0",            # layer 0, two linears fused along out dim
    "w1h", "w1n", "b1",    # layer 1, concat removed (h-part / node-part), fused out
    "wsth", "wstn", "bst", # aggregation, concat removed, sigmoid+tanh fused out
    "wl", "bl",            # readout
    "wo_t", "bo",          # output layer (weight transposed -> lane-dense result)
)


def _fuse_params(p):
    """Host-side weight preprocessing: split concat inputs, fuse shared-input pairs."""
    h1 = p["w1_0"].shape[1]   # 128  (graph conv 0 width)
    h2 = p["w1_1"].shape[1]   # 64   (graph conv 1 width)
    return {
        # GraphConvolution 0: node @ [w1|w2]  -> (BT*N, 2*h1)
        "w0":  jnp.concatenate([p["w1_0"], p["w2_0"]], axis=1),
        "b0":  jnp.concatenate([p["b1_0"], p["b2_0"]], axis=1),
        # GraphConvolution 1: [h1|node] @ w  ==  h1 @ w_top + node @ w_bot
        "w1h": jnp.concatenate([p["w1_1"][:h1], p["w2_1"][:h1]], axis=1),
        "w1n": jnp.concatenate([p["w1_1"][h1:], p["w2_1"][h1:]], axis=1),
        "b1":  jnp.concatenate([p["b1_1"], p["b2_1"]], axis=1),
        # GraphAggregation: [h2|node] @ [ws|wt]
        "wsth": jnp.concatenate([p["ws"][:h2], p["wt"][:h2]], axis=1),
        "wstn": jnp.concatenate([p["ws"][h2:], p["wt"][h2:]], axis=1),
        "bst":  jnp.concatenate([p["bs"], p["bt"]], axis=1),
        # readout / output
        "wl": p["wl"], "bl": p["bl"],
        "wo_t": p["wo"].T,        # (1, 64) -> gives a lane-major (1, TILE_B) result
        "bo": p["bo"],
    }


def _discriminator_kernel(node_ref, adj_ref,
                          w0, b0, w1h, w1n, b1,
                          wsth, wstn, bst,
                          wl, bl, wo_t, bo,
                          out_ref):
    f32 = jnp.float32
    bt, n, _ = node_ref.shape
    node3 = node_ref[...]                       # (BT, N, F)
    adj3 = adj_ref[...]                         # (BT, N, N)
    nodef = node3.reshape(bt * n, node3.shape[-1])   # (BT*N, F) batch on sublanes

    # --- GraphConvolution 0 (annotations = node); both linears fused ---
    c0 = w0.shape[1] // 2                       # 128
    l0 = jnp.dot(nodef, w0[...], preferred_element_type=f32) + b0[...]
    lin1 = l0[:, :c0].reshape(bt, n, c0)
    lin2 = l0[:, c0:]                           # (BT*N, c0)
    h1 = jnp.einsum("bij,bjk->bik", adj3, lin1,
                    preferred_element_type=f32).reshape(bt * n, c0) + lin2

    # --- GraphConvolution 1 (annotations = [h1 | node]); concat-free, fused ---
    c1 = w1h.shape[1] // 2                      # 64
    l1 = (jnp.dot(h1, w1h[...], preferred_element_type=f32)
          + jnp.dot(nodef, w1n[...], preferred_element_type=f32) + b1[...])
    lin1 = l1[:, :c1].reshape(bt, n, c1)
    lin2 = l1[:, c1:]                           # (BT*N, c1)
    h2 = jnp.einsum("bij,bjk->bik", adj3, lin1,
                    preferred_element_type=f32).reshape(bt * n, c1) + lin2

    # --- GraphAggregation: sum_n sigmoid(.) * tanh(.); concat-free, fused ---
    ca = wsth.shape[1] // 2                     # 128
    st = (jnp.dot(h2, wsth[...], preferred_element_type=f32)
          + jnp.dot(nodef, wstn[...], preferred_element_type=f32) + bst[...])
    gate = jax.nn.sigmoid(st[:, :ca])
    feat = jnp.tanh(st[:, ca:])
    agg = jnp.tanh(jnp.sum((gate * feat).reshape(bt, n, ca), axis=1))   # (BT, ca)

    # --- readout for all BT graphs at once ---
    h = jnp.tanh(jnp.dot(agg, wl[...], preferred_element_type=f32) + bl[...])  # (BT, 64)
    out_row = jax.lax.dot_general(                                             # (1, BT)
        wo_t[...], h, dimension_numbers=(((1,), (1,)), ((), ())),
        preferred_element_type=f32) + bo[...]
    out_ref[...] = out_row.reshape(1, 1, bt)


def molgan_discriminator(node, adj, params, *, tile_b=8):
    B, N, F = node.shape
    fused = _fuse_params(params)
    flat = [fused[k] for k in FUSED_ORDER]

    # Pad batch to a multiple of the per-step graph tile.
    n_steps = pl.cdiv(B, tile_b)
    b_pad = n_steps * tile_b
    if b_pad != B:
        pad = b_pad - B
        node = jnp.pad(node, ((0, pad), (0, 0), (0, 0)))
        adj = jnp.pad(adj, ((0, pad), (0, 0), (0, 0)))

    in_specs = [
        pl.BlockSpec((tile_b, N, F), lambda g: (g, 0, 0)),
        pl.BlockSpec((tile_b, N, N), lambda g: (g, 0, 0)),
    ] + [pl.BlockSpec(p.shape, lambda g, nd=p.ndim: (0,) * nd) for p in flat]

    out = pl.pallas_call(
        _discriminator_kernel,
        out_shape=jax.ShapeDtypeStruct((n_steps, 1, tile_b), jnp.float32),
        grid_spec=pltpu.PrefetchScalarGridSpec(
            num_scalar_prefetch=0,
            grid=(n_steps,),
            in_specs=in_specs,
            out_specs=pl.BlockSpec((1, 1, tile_b), lambda g: (g, 0, 0)),
        ),
        compiler_params=pltpu.CompilerParams(
            dimension_semantics=("parallel",)),   # independent graph tiles (2 TC on v7x)
    )(node, adj, *flat)
    return out.reshape(b_pad, 1)[:B]


def _linear_params(key, fan_in, fan_out):
    kw, kb = jax.random.split(key)
    bound = 1.0 / jnp.sqrt(jnp.float32(fan_in))
    w = jax.random.uniform(kw, (fan_in, fan_out), jnp.float32, -bound, bound)
    b = jax.random.uniform(kb, (1, fan_out), jnp.float32, -bound, bound)
    return w, b


def init_params(key, node_feature_dim):
    F = node_feature_dim
    aux = 128
    keys = jax.random.split(key, 8)
    p = {}
    # GraphConvolution 0: in=F, out=128 (two linears: pre-adj and skip)
    p["w1_0"], p["b1_0"] = _linear_params(keys[0], F, 128)
    p["w2_0"], p["b2_0"] = _linear_params(keys[1], F, 128)
    # GraphConvolution 1: in=128+F, out=64
    p["w1_1"], p["b1_1"] = _linear_params(keys[2], 128 + F, 64)
    p["w2_1"], p["b2_1"] = _linear_params(keys[3], 128 + F, 64)
    # GraphAggregation: in=64+F, out=aux(=128)
    p["ws"], p["bs"] = _linear_params(keys[4], 64 + F, aux)
    p["wt"], p["bt"] = _linear_params(keys[5], 64 + F, aux)
    # linear_layer: aux -> 64 (Tanh)
    p["wl"], p["bl"] = _linear_params(keys[6], aux, 64)
    # output_layer: 64 -> 1
    p["wo"], p["bo"] = _linear_params(keys[7], 64, 1)
    return p


def reference(node, adj, p):
    """Pure-JAX mirror of the PyTorch forward, for verification."""
    def lin(x, w, b):
        return x @ w + b
    h1 = jnp.einsum("bij,bjk->bik", adj, lin(node, p["w1_0"], p["b1_0"])) \
        + lin(node, p["w2_0"], p["b2_0"])
    ann1 = jnp.concatenate([h1, node], axis=-1)
    h2 = jnp.einsum("bij,bjk->bik", adj, lin(ann1, p["w1_1"], p["b1_1"])) \
        + lin(ann1, p["w2_1"], p["b2_1"])
    ann2 = jnp.concatenate([h2, node], axis=-1)
    i = jax.nn.sigmoid(lin(ann2, p["ws"], p["bs"]))
    j = jnp.tanh(lin(ann2, p["wt"], p["bt"]))
    agg = jnp.tanh(jnp.sum(i * j, axis=1))
    h = jnp.tanh(agg @ p["wl"] + p["bl"])
    return h @ p["wo"] + p["bo"]


if __name__ == "__main__":
    B, N, F = 12, 16, 8   # batch (not a multiple of the tile -> exercises padding)
    key = jax.random.PRNGKey(0)
    kn, ka, kp = jax.random.split(key, 3)

    node = jax.random.normal(kn, (B, N, F), jnp.float32)
    adj_raw = jax.random.uniform(ka, (B, N, N), jnp.float32)
    adj = 0.5 * (adj_raw + jnp.swapaxes(adj_raw, 1, 2))   # symmetric adjacency

    params = init_params(kp, F)

    fwd = jax.jit(functools.partial(molgan_discriminator, tile_b=8))
    out = jax.block_until_ready(fwd(node, adj, params))
    ref = reference(node, adj, params)

    assert out.shape == (B, 1), out.shape
    assert jnp.allclose(out, ref, atol=1e-4, rtol=1e-4), (out, ref)
    print("KERNEL_OK")
</pallas_src>

<mosaic_0001>
module attributes {stable_mosaic.version = 11 : i64} {
  func.func @_discriminator_kernel(%arg0: i32, %arg1: memref<8x16x8xf32, #tpu.memory_space<vmem>>, %arg2: memref<8x16x16xf32, #tpu.memory_space<vmem>>, %arg3: memref<8x256xf32, #tpu.memory_space<vmem>>, %arg4: memref<1x256xf32, #tpu.memory_space<vmem>>, %arg5: memref<128x128xf32, #tpu.memory_space<vmem>>, %arg6: memref<8x128xf32, #tpu.memory_space<vmem>>, %arg7: memref<1x128xf32, #tpu.memory_space<vmem>>, %arg8: memref<64x256xf32, #tpu.memory_space<vmem>>, %arg9: memref<8x256xf32, #tpu.memory_space<vmem>>, %arg10: memref<1x256xf32, #tpu.memory_space<vmem>>, %arg11: memref<128x64xf32, #tpu.memory_space<vmem>>, %arg12: memref<1x64xf32, #tpu.memory_space<vmem>>, %arg13: memref<1x64xf32, #tpu.memory_space<vmem>>, %arg14: memref<1x1xf32, #tpu.memory_space<vmem>>, %arg15: memref<1x1x8xf32, #tpu.memory_space<vmem>>) attributes {dimension_semantics = [#tpu.dimension_semantics<parallel>], iteration_bounds = array<i64: 2>, scalar_prefetch = 0 : i64, scratch_operands = 0 : i64, tpu.core_type = #tpu.core_type<tc>, window_params = [{transform_indices = @transform_0, window_bounds = array<i64: 8, 16, 8>}, {transform_indices = @transform_1, window_bounds = array<i64: 8, 16, 16>}, {pipeline_mode = #tpu.pipeline_mode<synchronous>, transform_indices = @transform_2, window_bounds = array<i64: 8, 256>}, {pipeline_mode = #tpu.pipeline_mode<synchronous>, transform_indices = @transform_3, window_bounds = array<i64: 1, 256>}, {pipeline_mode = #tpu.pipeline_mode<synchronous>, transform_indices = @transform_4, window_bounds = array<i64: 128, 128>}, {pipeline_mode = #tpu.pipeline_mode<synchronous>, transform_indices = @transform_5, window_bounds = array<i64: 8, 128>}, {pipeline_mode = #tpu.pipeline_mode<synchronous>, transform_indices = @transform_6, window_bounds = array<i64: 1, 128>}, {pipeline_mode = #tpu.pipeline_mode<synchronous>, transform_indices = @transform_7, window_bounds = array<i64: 64, 256>}, {pipeline_mode = #tpu.pipeline_mode<synchronous>, transform_indices = @transform_8, window_bounds = array<i64: 8, 256>}, {pipeline_mode = #tpu.pipeline_mode<synchronous>, transform_indices = @transform_9, window_bounds = array<i64: 1, 256>}, {pipeline_mode = #tpu.pipeline_mode<synchronous>, transform_indices = @transform_10, window_bounds = array<i64: 128, 64>}, {pipeline_mode = #tpu.pipeline_mode<synchronous>, transform_indices = @transform_11, window_bounds = array<i64: 1, 64>}, {pipeline_mode = #tpu.pipeline_mode<synchronous>, transform_indices = @transform_12, window_bounds = array<i64: 1, 64>}, {pipeline_mode = #tpu.pipeline_mode<synchronous>, transform_indices = @transform_13, window_bounds = array<i64: 1, 1>}, {transform_indices = @transform_14, window_bounds = array<i64: 1, 1, 8>}]} {
    %c0 = arith.constant 0 : index
    %c0_0 = arith.constant 0 : index
    %c0_1 = arith.constant 0 : index
    %0 = vector.load %arg1[%c0, %c0_0, %c0_1] : memref<8x16x8xf32, #tpu.memory_space<vmem>>, vector<8x16x8xf32>
    %c0_2 = arith.constant 0 : index
    %c0_3 = arith.constant 0 : index
    %c0_4 = arith.constant 0 : index
    %1 = vector.load %arg2[%c0_2, %c0_3, %c0_4] : memref<8x16x16xf32, #tpu.memory_space<vmem>>, vector<8x16x16xf32>
    %2 = vector.shape_cast %0 : vector<8x16x8xf32> to vector<128x8xf32>
    %c0_5 = arith.constant 0 : index
    %c0_6 = arith.constant 0 : index
    %3 = vector.load %arg3[%c0_5, %c0_6] : memref<8x256xf32, #tpu.memory_space<vmem>>, vector<8x256xf32>
    %cst = arith.constant dense<0.000000e+00> : vector<128x256xf32>
    %4 = tpu.matmul %2, %3, %cst {dimension_numbers = #tpu.dot_dimension_numbers<[1], [0], [0], [1], [0, 0, 1, 1], [], []>} : vector<128x8xf32>, vector<8x256xf32>, vector<128x256xf32> -> vector<128x256xf32>
    %c0_7 = arith.constant 0 : index
    %c0_8 = arith.constant 0 : index
    %5 = vector.load %arg4[%c0_7, %c0_8] : memref<1x256xf32, #tpu.memory_space<vmem>>, vector<1x256xf32>
    %6 = vector.broadcast %5 : vector<1x256xf32> to vector<128x256xf32>
    %7 = arith.addf %4, %6 : vector<128x256xf32>
    %8 = vector.extract_strided_slice %7 {offsets = [0, 0], sizes = [128, 128], strides = [1, 1]} : vector<128x256xf32> to vector<128x128xf32>
    %9 = vector.shape_cast %8 : vector<128x128xf32> to vector<8x16x128xf32>
    %10 = vector.extract_strided_slice %7 {offsets = [0, 128], sizes = [128, 128], strides = [1, 1]} : vector<128x256xf32> to vector<128x128xf32>
    "tpu.trace_start"() <{level = 10 : i32, message = "bij,bjk->bik"}> : () -> ()
    %cst_9 = arith.constant dense<0.000000e+00> : vector<8x16x128xf32>
    %11 = tpu.matmul %1, %9, %cst_9 {dimension_numbers = #tpu.dot_dimension_numbers<[2], [1], [1], [2], [0, 0, 0, 1, 1, 2], [0], [0]>} : vector<8x16x16xf32>, vector<8x16x128xf32>, vector<8x16x128xf32> -> vector<8x16x128xf32>
    "tpu.trace_stop"() : () -> ()
    %12 = vector.shape_cast %11 : vector<8x16x128xf32> to vector<128x128xf32>
    %13 = arith.addf %12, %10 : vector<128x128xf32>
    %c0_10 = arith.constant 0 : index
    %c0_11 = arith.constant 0 : index
    %14 = vector.load %arg5[%c0_10, %c0_11] : memref<128x128xf32, #tpu.memory_space<vmem>>, vector<128x128xf32>
    %cst_12 = arith.constant dense<0.000000e+00> : vector<128x128xf32>
    %15 = tpu.matmul %13, %14, %cst_12 {dimension_numbers = #tpu.dot_dimension_numbers<[1], [0], [0], [1], [0, 0, 1, 1], [], []>} : vector<128x128xf32>, vector<128x128xf32>, vector<128x128xf32> -> vector<128x128xf32>
    %c0_13 = arith.constant 0 : index
    %c0_14 = arith.constant 0 : index
    %16 = vector.load %arg6[%c0_13, %c0_14] : memref<8x128xf32, #tpu.memory_space<vmem>>, vector<8x128xf32>
    %cst_15 = arith.constant dense<0.000000e+00> : vector<128x128xf32>
    %17 = tpu.matmul %2, %16, %cst_15 {dimension_numbers = #tpu.dot_dimension_numbers<[1], [0], [0], [1], [0, 0, 1, 1], [], []>} : vector<128x8xf32>, vector<8x128xf32>, vector<128x128xf32> -> vector<128x128xf32>
    %18 = arith.addf %15, %17 : vector<128x128xf32>
    %c0_16 = arith.constant 0 : index
    %c0_17 = arith.constant 0 : index
    %19 = vector.load %arg7[%c0_16, %c0_17] : memref<1x128xf32, #tpu.memory_space<vmem>>, vector<1x128xf32>
    %20 = vector.broadcast %19 : vector<1x128xf32> to vector<128x128xf32>
    %21 = arith.addf %18, %20 : vector<128x128xf32>
    %22 = vector.extract_strided_slice %21 {offsets = [0, 0], sizes = [128, 64], strides = [1, 1]} : vector<128x128xf32> to vector<128x64xf32>
    %23 = vector.shape_cast %22 : vector<128x64xf32> to vector<8x16x64xf32>
    %24 = vector.extract_strided_slice %21 {offsets = [0, 64], sizes = [128, 64], strides = [1, 1]} : vector<128x128xf32> to vector<128x64xf32>
    "tpu.trace_start"() <{level = 10 : i32, message = "bij,bjk->bik"}> : () -> ()
    %cst_18 = arith.constant dense<0.000000e+00> : vector<8x16x64xf32>
    %25 = tpu.matmul %1, %23, %cst_18 {dimension_numbers = #tpu.dot_dimension_numbers<[2], [1], [1], [2], [0, 0, 0, 1, 1, 2], [0], [0]>} : vector<8x16x16xf32>, vector<8x16x64xf32>, vector<8x16x64xf32> -> vector<8x16x64xf32>
    "tpu.trace_stop"() : () -> ()
    %26 = vector.shape_cast %25 : vector<8x16x64xf32> to vector<128x64xf32>
    %27 = arith.addf %26, %24 : vector<128x64xf32>
    %c0_19 = arith.constant 0 : index
    %c0_20 = arith.constant 0 : index
    %28 = vector.load %arg8[%c0_19, %c0_20] : memref<64x256xf32, #tpu.memory_space<vmem>>, vector<64x256xf32>
    %cst_21 = arith.constant dense<0.000000e+00> : vector<128x256xf32>
    %29 = tpu.matmul %27, %28, %cst_21 {dimension_numbers = #tpu.dot_dimension_numbers<[1], [0], [0], [1], [0, 0, 1, 1], [], []>} : vector<128x64xf32>, vector<64x256xf32>, vector<128x256xf32> -> vector<128x256xf32>
    %c0_22 = arith.constant 0 : index
    %c0_23 = arith.constant 0 : index
    %30 = vector.load %arg9[%c0_22, %c0_23] : memref<8x256xf32, #tpu.memory_space<vmem>>, vector<8x256xf32>
    %cst_24 = arith.constant dense<0.000000e+00> : vector<128x256xf32>
    %31 = tpu.matmul %2, %30, %cst_24 {dimension_numbers = #tpu.dot_dimension_numbers<[1], [0], [0], [1], [0, 0, 1, 1], [], []>} : vector<128x8xf32>, vector<8x256xf32>, vector<128x256xf32> -> vector<128x256xf32>
    %32 = arith.addf %29, %31 : vector<128x256xf32>
    %c0_25 = arith.constant 0 : index
    %c0_26 = arith.constant 0 : index
    %33 = vector.load %arg10[%c0_25, %c0_26] : memref<1x256xf32, #tpu.memory_space<vmem>>, vector<1x256xf32>
    %34 = vector.broadcast %33 : vector<1x256xf32> to vector<128x256xf32>
    %35 = arith.addf %32, %34 : vector<128x256xf32>
    %36 = vector.extract_strided_slice %35 {offsets = [0, 0], sizes = [128, 128], strides = [1, 1]} : vector<128x256xf32> to vector<128x128xf32>
    %37 = arith.negf %36 : vector<128x128xf32>
    %38 = math.exp %37 : vector<128x128xf32>
    %cst_27 = arith.constant 1.000000e+00 : f32
    %39 = vector.broadcast %cst_27 : f32 to vector<128x128xf32>
    %40 = arith.addf %39, %38 : vector<128x128xf32>
    %41 = arith.divf %39, %40 : vector<128x128xf32>
    %42 = vector.extract_strided_slice %35 {offsets = [0, 128], sizes = [128, 128], strides = [1, 1]} : vector<128x256xf32> to vector<128x128xf32>
    %43 = math.tanh %42 : vector<128x128xf32>
    %44 = arith.mulf %41, %43 : vector<128x128xf32>
    %45 = vector.shape_cast %44 : vector<128x128xf32> to vector<8x16x128xf32>
    %cst_28 = arith.constant dense<0.000000e+00> : vector<8x128xf32>
    %46 = vector.multi_reduction <add>, %45, %cst_28 [1] : vector<8x16x128xf32> to vector<8x128xf32>
    %47 = math.tanh %46 : vector<8x128xf32>
    %c0_29 = arith.constant 0 : index
    %c0_30 = arith.constant 0 : index
    %48 = vector.load %arg11[%c0_29, %c0_30] : memref<128x64xf32, #tpu.memory_space<vmem>>, vector<128x64xf32>
    %cst_31 = arith.constant dense<0.000000e+00> : vector<8x64xf32>
    %49 = tpu.matmul %47, %48, %cst_31 {dimension_numbers = #tpu.dot_dimension_numbers<[1], [0], [0], [1], [0, 0, 1, 1], [], []>} : vector<8x128xf32>, vector<128x64xf32>, vector<8x64xf32> -> vector<8x64xf32>
    %c0_32 = arith.constant 0 : index
    %c0_33 = arith.constant 0 : index
    %50 = vector.load %arg12[%c0_32, %c0_33] : memref<1x64xf32, #tpu.memory_space<vmem>>, vector<1x64xf32>
    %51 = vector.broadcast %50 : vector<1x64xf32> to vector<8x64xf32>
    %52 = arith.addf %49, %51 : vector<8x64xf32>
    %53 = math.tanh %52 : vector<8x64xf32>
    %c0_34 = arith.constant 0 : index
    %c0_35 = arith.constant 0 : index
    %54 = vector.load %arg13[%c0_34, %c0_35] : memref<1x64xf32, #tpu.memory_space<vmem>>, vector<1x64xf32>
    %cst_36 = arith.constant dense<0.000000e+00> : vector<1x8xf32>
    %55 = tpu.matmul %54, %53, %cst_36 {dimension_numbers = #tpu.dot_dimension_numbers<[1], [1], [0], [0], [0, 0, 1, 0], [], []>} : vector<1x64xf32>, vector<8x64xf32>, vector<1x8xf32> -> vector<1x8xf32>
    %c0_37 = arith.constant 0 : index
    %c0_38 = arith.constant 0 : index
    %56 = vector.load %arg14[%c0_37, %c0_38] : memref<1x1xf32, #tpu.memory_space<vmem>>, vector<1x1xf32>
    %57 = vector.broadcast %56 : vector<1x1xf32> to vector<1x8xf32>
    %58 = arith.addf %55, %57 : vector<1x8xf32>
    %59 = vector.shape_cast %58 : vector<1x8xf32> to vector<1x1x8xf32>
    %c0_39 = arith.constant 0 : index
    %c0_40 = arith.constant 0 : index
    %c0_41 = arith.constant 0 : index
    %60 = vector.load %arg15[%c0_39, %c0_40, %c0_41] : memref<1x1x8xf32, #tpu.memory_space<vmem>>, vector<1x1x8xf32>
    tpu.vector_store %arg15[%c0_39, %c0_40, %c0_41], %59 {strides = array<i32>} : memref<1x1x8xf32, #tpu.memory_space<vmem>>, vector<1x1x8xf32>,
    return
  }
  func.func @transform_0(%arg0: i32) -> (i32, i32, i32) {
    %c0_i32 = arith.constant 0 : i32
    %c0_i32_0 = arith.constant 0 : i32
    %c0_i32_1 = arith.constant 0 : i32
    return %arg0, %c0_i32, %c0_i32_0 : i32, i32, i32
  }
  func.func @transform_1(%arg0: i32) -> (i32, i32, i32) {
    %c0_i32 = arith.constant 0 : i32
    %c0_i32_0 = arith.constant 0 : i32
    %c0_i32_1 = arith.constant 0 : i32
    return %arg0, %c0_i32, %c0_i32_0 : i32, i32, i32
  }
  func.func @transform_2(%arg0: i32) -> (i32, i32) {
    %c0_i32 = arith.constant 0 : i32
    %c0_i32_0 = arith.constant 0 : i32
    %c0_i32_1 = arith.constant 0 : i32
    return %c0_i32, %c0_i32_0 : i32, i32
  }
  func.func @transform_3(%arg0: i32) -> (i32, i32) {
    %c0_i32 = arith.constant 0 : i32
    %c0_i32_0 = arith.constant 0 : i32
    %c0_i32_1 = arith.constant 0 : i32
    return %c0_i32, %c0_i32_0 : i32, i32
  }
  func.func @transform_4(%arg0: i32) -> (i32, i32) {
    %c0_i32 = arith.constant 0 : i32
    %c0_i32_0 = arith.constant 0 : i32
    %c0_i32_1 = arith.constant 0 : i32
    return %c0_i32, %c0_i32_0 : i32, i32
  }
  func.func @transform_5(%arg0: i32) -> (i32, i32) {
    %c0_i32 = arith.constant 0 : i32
    %c0_i32_0 = arith.constant 0 : i32
    %c0_i32_1 = arith.constant 0 : i32
    return %c0_i32, %c0_i32_0 : i32, i32
  }
  func.func @transform_6(%arg0: i32) -> (i32, i32) {
    %c0_i32 = arith.constant 0 : i32
    %c0_i32_0 = arith.constant 0 : i32
    %c0_i32_1 = arith.constant 0 : i32
    return %c0_i32, %c0_i32_0 : i32, i32
  }
  func.func @transform_7(%arg0: i32) -> (i32, i32) {
    %c0_i32 = arith.constant 0 : i32
    %c0_i32_0 = arith.constant 0 : i32
    %c0_i32_1 = arith.constant 0 : i32
    return %c0_i32, %c0_i32_0 : i32, i32
  }
  func.func @transform_8(%arg0: i32) -> (i32, i32) {
    %c0_i32 = arith.constant 0 : i32
    %c0_i32_0 = arith.constant 0 : i32
    %c0_i32_1 = arith.constant 0 : i32
    return %c0_i32, %c0_i32_0 : i32, i32
  }
  func.func @transform_9(%arg0: i32) -> (i32, i32) {
    %c0_i32 = arith.constant 0 : i32
    %c0_i32_0 = arith.constant 0 : i32
    %c0_i32_1 = arith.constant 0 : i32
    return %c0_i32, %c0_i32_0 : i32, i32
  }
  func.func @transform_10(%arg0: i32) -> (i32, i32) {
    %c0_i32 = arith.constant 0 : i32
    %c0_i32_0 = arith.constant 0 : i32
    %c0_i32_1 = arith.constant 0 : i32
    return %c0_i32, %c0_i32_0 : i32, i32
  }
  func.func @transform_11(%arg0: i32) -> (i32, i32) {
    %c0_i32 = arith.constant 0 : i32
    %c0_i32_0 = arith.constant 0 : i32
    %c0_i32_1 = arith.constant 0 : i32
    return %c0_i32, %c0_i32_0 : i32, i32
  }
  func.func @transform_12(%arg0: i32) -> (i32, i32) {
    %c0_i32 = arith.constant 0 : i32
    %c0_i32_0 = arith.constant 0 : i32
    %c0_i32_1 = arith.constant 0 : i32
    return %c0_i32, %c0_i32_0 : i32, i32
  }
  func.func @transform_13(%arg0: i32) -> (i32, i32) {
    %c0_i32 = arith.constant 0 : i32
    %c0_i32_0 = arith.constant 0 : i32
    %c0_i32_1 = arith.constant 0 : i32
    return %c0_i32, %c0_i32_0 : i32, i32
  }
  func.func @transform_14(%arg0: i32) -> (i32, i32, i32) {
    %c0_i32 = arith.constant 0 : i32
    %c0_i32_0 = arith.constant 0 : i32
    %c0_i32_1 = arith.constant 0 : i32
    return %arg0, %c0_i32, %c0_i32_0 : i32, i32, i32
  }
}

</mosaic_0001>

<llo_original>
// kernel: molgan_discriminator.1
$region0: #{molgan_discriminator.1}
  #allocation0 [shape = 'u32[]', space=smem, size = 0x4, offset = 0x4, fixed_abs, tag = 'smem constant byte address 0x4 - core index']
  #allocation1 [shape = 'u32[72,128]{1,0:T(1,128)}', space=vmem, size = 0x9000, scoped, tag = 'internal scratch']
  #allocation2 [shape = 'f32[1,1]{1,0:T(1,128)S(1)}', space=vmem, size = 0x200, scoped, tag = 'scoped memory for molgan_discriminator.1']
  %s0 = inlined_call_operand.vmem [shape: f32[16,16,8], index: 0, kind: input, shape index: {}]
  %s1 = inlined_call_operand.vmem [shape: f32[16,16,16], index: 1, kind: input, shape index: {}]
  %s2 = inlined_call_operand.vmem [shape: f32[8,256], index: 2, kind: input, shape index: {}]
  %s3 = inlined_call_operand.vmem [shape: f32[1,256], index: 3, kind: input, shape index: {}]
  %s4 = inlined_call_operand.vmem [shape: f32[128,128], index: 4, kind: input, shape index: {}]
  %s5 = inlined_call_operand.vmem [shape: f32[8,128], index: 5, kind: input, shape index: {}]
  %s6 = inlined_call_operand.vmem [shape: f32[1,128], index: 6, kind: input, shape index: {}]
  %s7 = inlined_call_operand.vmem [shape: f32[64,256], index: 7, kind: input, shape index: {}]
  %s8 = inlined_call_operand.vmem [shape: f32[8,256], index: 8, kind: input, shape index: {}]
  %s9 = inlined_call_operand.vmem [shape: f32[1,256], index: 9, kind: input, shape index: {}]
  %s10 = inlined_call_operand.vmem [shape: f32[128,64], index: 10, kind: input, shape index: {}]
  %s11 = inlined_call_operand.vmem [shape: f32[1,64], index: 11, kind: input, shape index: {}]
  %s12 = inlined_call_operand.vmem [shape: f32[1,64], index: 12, kind: input, shape index: {}]
  %s13 = inlined_call_operand.<no memory space> [shape: f32[1,1], index: 13, kind: input, shape index: {}]
  %s14 = inlined_call_operand.vmem [shape: f32[2,1,8], index: 14, kind: output, shape index: {}]
  %s15 = sld [smem:[#allocation0]]
  $region89: #{molgan_discriminator.1} parent=0
    _
  %s17 = ssub.s32 1, %s15
  %s18 = scalar_select 0, %s17, %s15
  %v19 = vstv %s13
  %20 = vst [vmem:[#allocation2] sm:$0x1] %v19
  loop: start=0, step=1, limit=4
  $region2: #{molgan_discriminator.1} parent=0 // loop_pre_header
    _
  $region3: #{molgan_discriminator.1} parent=0 // loop_header
    %s22 = sphi 0, %s26
    %p23 = scmp.ge.s32.totalorder %s22, 4
    %s32 = sphi 0, %s34
    %s35 = sphi 0, %s32
    %s36 = sphi 0, %s35
    %s52 = sphi 0, %s36
    %s58 = sphi 0, %s60
    %s61 = sphi 0, %s58
    %s62 = sphi 0, %s61
    %s78 = sphi 0, %s62
    %s82 = sphi 0, %s82
    %s84 = sphi 0, %s82
    %s85 = sphi 0, %s84
    %s99 = sphi 0, %s85
    %s103 = sphi 0, %s103
    %s105 = sphi 0, %s103
    %s106 = sphi 0, %s105
    %s120 = sphi 0, %s106
    %s124 = sphi 0, %s124
    %s126 = sphi 0, %s124
    %s127 = sphi 0, %s126
    %s141 = sphi 0, %s127
    %s145 = sphi 0, %s145
    %s147 = sphi 0, %s145
    %s148 = sphi 0, %s147
    %s162 = sphi 0, %s148
    %s166 = sphi 0, %s166
    %s168 = sphi 0, %s166
    %s169 = sphi 0, %s168
    %s183 = sphi 0, %s169
    %s187 = sphi 0, %s187
    %s189 = sphi 0, %s187
    %s190 = sphi 0, %s189
    %s204 = sphi 0, %s190
    %s208 = sphi 0, %s208
    %s210 = sphi 0, %s208
    %s211 = sphi 0, %s210
    %s225 = sphi 0, %s211
    %s229 = sphi 0, %s229
    %s231 = sphi 0, %s229
    %s232 = sphi 0, %s231
    %s246 = sphi 0, %s232
    %s250 = sphi 0, %s250
    %s252 = sphi 0, %s250
    %s253 = sphi 0, %s252
    %s267 = sphi 0, %s253
    %s271 = sphi 0, %s271
    %s273 = sphi 0, %s271
    %s274 = sphi 0, %s273
    %s288 = sphi 0, %s274
    %s292 = sphi 0, %s292
    %s294 = sphi 0, %s292
    %s295 = sphi 0, %s294
    %s309 = sphi 0, %s295
    %s313 = sphi 0, %s313
    %s315 = sphi 0, %s313
    %s316 = sphi 0, %s315
    %s330 = sphi 0, %s316
    %s336 = sphi 0, %s338
    %s339 = sphi 0, %s336
    %s340 = sphi 0, %s339
    %s356 = sphi 0, %s340
  $region4: #{molgan_discriminator.1} parent=0 // loop_header_branch
    %25 = sbr.rel (%p23) target = $region8
  $region5: #{molgan_discriminator.1} parent=0 // loop_body
    %s27 = ssub.s32 %s22, 1
    %s28 = ssub.s32 %s22, 2
    %s29 = sadd.s32 %s22, 1
    %s30 = ssub.s32 %s22, %s29
    %p31 = scmp.eq.s32.totalorder %s30, 0
    %s33 = sadd.s32 %s32, 1
    %s34 = scalar_select %p31, %s32, %s33
    %p37 = pneg %p31
    %p38 = scmp.eq.s32.totalorder %s22, 1
    %p39 = por %p37, %p38
    %p40 = scmp.ne.s32.totalorder %s32, %s35
    %p41 = scmp.eq.s32.totalorder %s22, 0
    %p42 = por %p40, %p41
    %p43 = scmp.ne.s32.totalorder %s32, %s35
    %p44 = scmp.eq.s32.totalorder %s27, 1
    %p45 = por %p43, %p44
    %p46 = scmp.ne.s32.totalorder %s35, %s36
    %p47 = scmp.eq.s32.totalorder %s27, 0
    %p48 = por %p46, %p47
    %p49 = scmp.ne.s32.totalorder %s35, %s36
    %p50 = scmp.eq.s32.totalorder %s28, 1
    %p51 = por %p49, %p50
    %p53 = scmp.ne.s32.totalorder %s36, %s52
    %p54 = scmp.eq.s32.totalorder %s28, 0
    %p55 = por %p53, %p54
    %s56 = ssub.s32 %s22, %s29
    %p57 = scmp.eq.s32.totalorder %s56, 0
    %s59 = sadd.s32 %s58, 1
    %s60 = scalar_select %p57, %s58, %s59
    %p63 = pneg %p57
    %p64 = scmp.eq.s32.totalorder %s22, 1
    %p65 = por %p63, %p64
    %p66 = scmp.ne.s32.totalorder %s58, %s61
    %p67 = scmp.eq.s32.totalorder %s22, 0
    %p68 = por %p66, %p67
    %p69 = scmp.ne.s32.totalorder %s58, %s61
    %p70 = scmp.eq.s32.totalorder %s27, 1
    %p71 = por %p69, %p70
    %p72 = scmp.ne.s32.totalorder %s61, %s62
    %p73 = scmp.eq.s32.totalorder %s27, 0
    %p74 = por %p72, %p73
    %p75 = scmp.ne.s32.totalorder %s61, %s62
    %p76 = scmp.eq.s32.totalorder %s28, 1
    %p77 = por %p75, %p76
    %p79 = scmp.ne.s32.totalorder %s62, %s78
    %p80 = scmp.eq.s32.totalorder %s28, 0
    %p81 = por %p79, %p80
    %s83 = sadd.s32 %s82, 1
    %p86 = scmp.eq.s32.totalorder %s22, 1
    %p87 = scmp.ne.s32.totalorder %s82, %s84
    %p88 = scmp.eq.s32.totalorder %s22, 0
    %p89 = por %p87, %p88
    %p90 = scmp.ne.s32.totalorder %s82, %s84
    %p91 = scmp.eq.s32.totalorder %s27, 1
    %p92 = por %p90, %p91
    %p93 = scmp.ne.s32.totalorder %s84, %s85
    %p94 = scmp.eq.s32.totalorder %s27, 0
    %p95 = por %p93, %p94
    %p96 = scmp.ne.s32.totalorder %s84, %s85
    %p97 = scmp.eq.s32.totalorder %s28, 1
    %p98 = por %p96, %p97
    %p100 = scmp.ne.s32.totalorder %s85, %s99
    %p101 = scmp.eq.s32.totalorder %s28, 0
    %p102 = por %p100, %p101
    %s104 = sadd.s32 %s103, 1
    %p107 = scmp.eq.s32.totalorder %s22, 1
    %p108 = scmp.ne.s32.totalorder %s103, %s105
    %p109 = scmp.eq.s32.totalorder %s22, 0
    %p110 = por %p108, %p109
    %p111 = scmp.ne.s32.totalorder %s103, %s105
    %p112 = scmp.eq.s32.totalorder %s27, 1
    %p113 = por %p111, %p112
    %p114 = scmp.ne.s32.totalorder %s105, %s106
    %p115 = scmp.eq.s32.totalorder %s27, 0
    %p116 = por %p114, %p115
    %p117 = scmp.ne.s32.totalorder %s105, %s106
    %p118 = scmp.eq.s32.totalorder %s28, 1
    %p119 = por %p117, %p118
    %p121 = scmp.ne.s32.totalorder %s106, %s120
    %p122 = scmp.eq.s32.totalorder %s28, 0
    %p123 = por %p121, %p122
    %s125 = sadd.s32 %s124, 1
    %p128 = scmp.eq.s32.totalorder %s22, 1
    %p129 = scmp.ne.s32.totalorder %s124, %s126
    %p130 = scmp.eq.s32.totalorder %s22, 0
    %p131 = por %p129, %p130
    %p132 = scmp.ne.s32.totalorder %s124, %s126
    %p133 = scmp.eq.s32.totalorder %s27, 1
    %p134 = por %p132, %p133
    %p135 = scmp.ne.s32.totalorder %s126, %s127
    %p136 = scmp.eq.s32.totalorder %s27, 0
    %p137 = por %p135, %p136
    %p138 = scmp.ne.s32.totalorder %s126, %s127
    %p139 = scmp.eq.s32.totalorder %s28, 1
    %p140 = por %p138, %p139
    %p142 = scmp.ne.s32.totalorder %s127, %s141
    %p143 = scmp.eq.s32.totalorder %s28, 0
    %p144 = por %p142, %p143
    %s146 = sadd.s32 %s145, 1
    %p149 = scmp.eq.s32.totalorder %s22, 1
    %p150 = scmp.ne.s32.totalorder %s145, %s147
    %p151 = scmp.eq.s32.totalorder %s22, 0
    %p152 = por %p150, %p151
    %p153 = scmp.ne.s32.totalorder %s145, %s147
    %p154 = scmp.eq.s32.totalorder %s27, 1
    %p155 = por %p153, %p154
    %p156 = scmp.ne.s32.totalorder %s147, %s148
    %p157 = scmp.eq.s32.totalorder %s27, 0
    %p158 = por %p156, %p157
    %p159 = scmp.ne.s32.totalorder %s147, %s148
    %p160 = scmp.eq.s32.totalorder %s28, 1
    %p161 = por %p159, %p160
    %p163 = scmp.ne.s32.totalorder %s148, %s162
    %p164 = scmp.eq.s32.totalorder %s28, 0
    %p165 = por %p163, %p164
    %s167 = sadd.s32 %s166, 1
    %p170 = scmp.eq.s32.totalorder %s22, 1
    %p171 = scmp.ne.s32.totalorder %s166, %s168
    %p172 = scmp.eq.s32.totalorder %s22, 0
    %p173 = por %p171, %p172
    %p174 = scmp.ne.s32.totalorder %s166, %s168
    %p175 = scmp.eq.s32.totalorder %s27, 1
    %p176 = por %p174, %p175
    %p177 = scmp.ne.s32.totalorder %s168, %s169
    %p178 = scmp.eq.s32.totalorder %s27, 0
    %p179 = por %p177, %p178
    %p180 = scmp.ne.s32.totalorder %s168, %s169
    %p181 = scmp.eq.s32.totalorder %s28, 1
    %p182 = por %p180, %p181
    %p184 = scmp.ne.s32.totalorder %s169, %s183
    %p185 = scmp.eq.s32.totalorder %s28, 0
    %p186 = por %p184, %p185
    %s188 = sadd.s32 %s187, 1
    %p191 = scmp.eq.s32.totalorder %s22, 1
    %p192 = scmp.ne.s32.totalorder %s187, %s189
    %p193 = scmp.eq.s32.totalorder %s22, 0
    %p194 = por %p192, %p193
    %p195 = scmp.ne.s32.totalorder %s187, %s189
    %p196 = scmp.eq.s32.totalorder %s27, 1
    %p197 = por %p195, %p196
    %p198 = scmp.ne.s32.totalorder %s189, %s190
    %p199 = scmp.eq.s32.totalorder %s27, 0
    %p200 = por %p198, %p199
    %p201 = scmp.ne.s32.totalorder %s189, %s190
    %p202 = scmp.eq.s32.totalorder %s28, 1
    %p203 = por %p201, %p202
    %p205 = scmp.ne.s32.totalorder %s190, %s204
    %p206 = scmp.eq.s32.totalorder %s28, 0
    %p207 = por %p205, %p206
    %s209 = sadd.s32 %s208, 1
    %p212 = scmp.eq.s32.totalorder %s22, 1
    %p213 = scmp.ne.s32.totalorder %s208, %s210
    %p214 = scmp.eq.s32.totalorder %s22, 0
    %p215 = por %p213, %p214
    %p216 = scmp.ne.s32.totalorder %s208, %s210
    %p217 = scmp.eq.s32.totalorder %s27, 1
    %p218 = por %p216, %p217
    %p219 = scmp.ne.s32.totalorder %s210, %s211
    %p220 = scmp.eq.s32.totalorder %s27, 0
    %p221 = por %p219, %p220
    %p222 = scmp.ne.s32.totalorder %s210, %s211
    %p223 = scmp.eq.s32.totalorder %s28, 1
    %p224 = por %p222, %p223
    %p226 = scmp.ne.s32.totalorder %s211, %s225
    %p227 = scmp.eq.s32.totalorder %s28, 0
    %p228 = por %p226, %p227
    %s230 = sadd.s32 %s229, 1
    %p233 = scmp.eq.s32.totalorder %s22, 1
    %p234 = scmp.ne.s32.totalorder %s229, %s231
    %p235 = scmp.eq.s32.totalorder %s22, 0
    %p236 = por %p234, %p235
    %p237 = scmp.ne.s32.totalorder %s229, %s231
    %p238 = scmp.eq.s32.totalorder %s27, 1
    %p239 = por %p237, %p238
    %p240 = scmp.ne.s32.totalorder %s231, %s232
    %p241 = scmp.eq.s32.totalorder %s27, 0
    %p242 = por %p240, %p241
    %p243 = scmp.ne.s32.totalorder %s231, %s232
    %p244 = scmp.eq.s32.totalorder %s28, 1
    %p245 = por %p243, %p244
    %p247 = scmp.ne.s32.totalorder %s232, %s246
    %p248 = scmp.eq.s32.totalorder %s28, 0
    %p249 = por %p247, %p248
    %s251 = sadd.s32 %s250, 1
    %p254 = scmp.eq.s32.totalorder %s22, 1
    %p255 = scmp.ne.s32.totalorder %s250, %s252
    %p256 = scmp.eq.s32.totalorder %s22, 0
    %p257 = por %p255, %p256
    %p258 = scmp.ne.s32.totalorder %s250, %s252
    %p259 = scmp.eq.s32.totalorder %s27, 1
    %p260 = por %p258, %p259
    %p261 = scmp.ne.s32.totalorder %s252, %s253
    %p262 = scmp.eq.s32.totalorder %s27, 0
    %p263 = por %p261, %p262
    %p264 = scmp.ne.s32.totalorder %s252, %s253
    %p265 = scmp.eq.s32.totalorder %s28, 1
    %p266 = por %p264, %p265
    %p268 = scmp.ne.s32.totalorder %s253, %s267
    %p269 = scmp.eq.s32.totalorder %s28, 0
    %p270 = por %p268, %p269
    %s272 = sadd.s32 %s271, 1
    %p275 = scmp.eq.s32.totalorder %s22, 1
    %p276 = scmp.ne.s32.totalorder %s271, %s273
    %p277 = scmp.eq.s32.totalorder %s22, 0
    %p278 = por %p276, %p277
    %p279 = scmp.ne.s32.totalorder %s271, %s273
    %p280 = scmp.eq.s32.totalorder %s27, 1
    %p281 = por %p279, %p280
    %p282 = scmp.ne.s32.totalorder %s273, %s274
    %p283 = scmp.eq.s32.totalorder %s27, 0
    %p284 = por %p282, %p283
    %p285 = scmp.ne.s32.totalorder %s273, %s274
    %p286 = scmp.eq.s32.totalorder %s28, 1
    %p287 = por %p285, %p286
    %p289 = scmp.ne.s32.totalorder %s274, %s288
    %p290 = scmp.eq.s32.totalorder %s28, 0
    %p291 = por %p289, %p290
    %s293 = sadd.s32 %s292, 1
    %p296 = scmp.eq.s32.totalorder %s22, 1
    %p297 = scmp.ne.s32.totalorder %s292, %s294
    %p298 = scmp.eq.s32.totalorder %s22, 0
    %p299 = por %p297, %p298
    %p300 = scmp.ne.s32.totalorder %s292, %s294
    %p301 = scmp.eq.s32.totalorder %s27, 1
    %p302 = por %p300, %p301
    %p303 = scmp.ne.s32.totalorder %s294, %s295
    %p304 = scmp.eq.s32.totalorder %s27, 0
    %p305 = por %p303, %p304
    %p306 = scmp.ne.s32.totalorder %s294, %s295
    %p307 = scmp.eq.s32.totalorder %s28, 1
    %p308 = por %p306, %p307
    %p310 = scmp.ne.s32.totalorder %s295, %s309
    %p311 = scmp.eq.s32.totalorder %s28, 0
    %p312 = por %p310, %p311
    %s314 = sadd.s32 %s313, 1
    %p317 = scmp.eq.s32.totalorder %s22, 1
    %p318 = scmp.ne.s32.totalorder %s313, %s315
    %p319 = scmp.eq.s32.totalorder %s22, 0
    %p320 = por %p318, %p319
    %p321 = scmp.ne.s32.totalorder %s313, %s315
    %p322 = scmp.eq.s32.totalorder %s27, 1
    %p323 = por %p321, %p322
    %p324 = scmp.ne.s32.totalorder %s315, %s316
    %p325 = scmp.eq.s32.totalorder %s27, 0
    %p326 = por %p324, %p325
    %p327 = scmp.ne.s32.totalorder %s315, %s316
    %p328 = scmp.eq.s32.totalorder %s28, 1
    %p329 = por %p327, %p328
    %p331 = scmp.ne.s32.totalorder %s316, %s330
    %p332 = scmp.eq.s32.totalorder %s28, 0
    %p333 = por %p331, %p332
    %s334 = ssub.s32 %s22, %s29
    %p335 = scmp.eq.s32.totalorder %s334, 0
    %s337 = sadd.s32 %s336, 1
    %s338 = scalar_select %p335, %s336, %s337
    %p341 = pneg %p335
    %p342 = scmp.eq.s32.totalorder %s22, 1
    %p343 = por %p341, %p342
    %p344 = scmp.ne.s32.totalorder %s336, %s339
    %p345 = scmp.eq.s32.totalorder %s22, 0
    %p346 = por %p344, %p345
    %p347 = scmp.ne.s32.totalorder %s336, %s339
    %p348 = scmp.eq.s32.totalorder %s27, 1
    %p349 = por %p347, %p348
    %p350 = scmp.ne.s32.totalorder %s339, %s340
    %p351 = scmp.eq.s32.totalorder %s27, 0
    %p352 = por %p350, %p351
    %p353 = scmp.ne.s32.totalorder %s339, %s340
    %p354 = scmp.eq.s32.totalorder %s28, 1
    %p355 = por %p353, %p354
    %p357 = scmp.ne.s32.totalorder %s340, %s356
    %p358 = scmp.eq.s32.totalorder %s28, 0
    %p359 = por %p357, %p358
    %p360 = scmp.le.s32.totalorder 1, %s22
    %p361 = scmp.lt.s32.totalorder %s22, 3
    %p362 = pnand %p360, %p361
    %p363 = pneg %p362
    // Predicated region
    $region9: #{molgan_discriminator.1} parent=5 // pred_check
      _
    $region10: #{molgan_discriminator.1} parent=5 // pred_check_branch
      %365 = sbr.rel (%p362) target = $region12
    $region11: #{molgan_discriminator.1} parent=5 // pred_region
      %s366 = ssub.s32 %s22, 1
      // Predicated region
      $region13: #{molgan_discriminator.1} parent=11 // pred_check
        %p367 = pneg %p95
      $region14: #{molgan_discriminator.1} parent=11 // pred_check_branch
        %369 = sbr.rel (%p367) target = $region16
      $region15: #{molgan_discriminator.1} parent=11 // pred_region
        _
      $region16: #{molgan_discriminator.1} parent=11 // pred_fallthru
        _
      // Predicated region
      $region17: #{molgan_discriminator.1} parent=11 // pred_check
        %p370 = pneg %p116
      $region18: #{molgan_discriminator.1} parent=11 // pred_check_branch
        %372 = sbr.rel (%p370) target = $region20
      $region19: #{molgan_discriminator.1} parent=11 // pred_region
        _
      $region20: #{molgan_discriminator.1} parent=11 // pred_fallthru
        _
      // Predicated region
      $region21: #{molgan_discriminator.1} parent=11 // pred_check
        %p373 = pneg %p137
      $region22: #{molgan_discriminator.1} parent=11 // pred_check_branch
        %375 = sbr.rel (%p373) target = $region24
      $region23: #{molgan_discriminator.1} parent=11 // pred_region
        _
      $region24: #{molgan_discriminator.1} parent=11 // pred_fallthru
        _
      // Predicated region
      $region25: #{molgan_discriminator.1} parent=11 // pred_check
        %p376 = pneg %p158
      $region26: #{molgan_discriminator.1} parent=11 // pred_check_branch
        %378 = sbr.rel (%p376) target = $region28
      $region27: #{molgan_discriminator.1} parent=11 // pred_region
        _
      $region28: #{molgan_discriminator.1} parent=11 // pred_fallthru
        _
      // Predicated region
      $region29: #{molgan_discriminator.1} parent=11 // pred_check
        %p379 = pneg %p179
      $region30: #{molgan_discriminator.1} parent=11 // pred_check_branch
        %381 = sbr.rel (%p379) target = $region32
      $region31: #{molgan_discriminator.1} parent=11 // pred_region
        _
      $region32: #{molgan_discriminator.1} parent=11 // pred_fallthru
        _
      // Predicated region
      $region33: #{molgan_discriminator.1} parent=11 // pred_check
        %p382 = pneg %p200
      $region34: #{molgan_discriminator.1} parent=11 // pred_check_branch
        %384 = sbr.rel (%p382) target = $region36
      $region35: #{molgan_discriminator.1} parent=11 // pred_region
        _
      $region36: #{molgan_discriminator.1} parent=11 // pred_fallthru
        _
      // Predicated region
      $region37: #{molgan_discriminator.1} parent=11 // pred_check
        %p385 = pneg %p221
      $region38: #{molgan_discriminator.1} parent=11 // pred_check_branch
        %387 = sbr.rel (%p385) target = $region40
      $region39: #{molgan_discriminator.1} parent=11 // pred_region
        _
      $region40: #{molgan_discriminator.1} parent=11 // pred_fallthru
        _
      // Predicated region
      $region41: #{molgan_discriminator.1} parent=11 // pred_check
        %p388 = pneg %p242
      $region42: #{molgan_discriminator.1} parent=11 // pred_check_branch
        %390 = sbr.rel (%p388) target = $region44
      $region43: #{molgan_discriminator.1} parent=11 // pred_region
        _
      $region44: #{molgan_discriminator.1} parent=11 // pred_fallthru
        _
      // Predicated region
      $region45: #{molgan_discriminator.1} parent=11 // pred_check
        %p391 = pneg %p263
      $region46: #{molgan_discriminator.1} parent=11 // pred_check_branch
        %393 = sbr.rel (%p391) target = $region48
      $region47: #{molgan_discriminator.1} parent=11 // pred_region
        _
      $region48: #{molgan_discriminator.1} parent=11 // pred_fallthru
        _
      // Predicated region
      $region49: #{molgan_discriminator.1} parent=11 // pred_check
        %p394 = pneg %p284
      $region50: #{molgan_discriminator.1} parent=11 // pred_check_branch
        %396 = sbr.rel (%p394) target = $region52
      $region51: #{molgan_discriminator.1} parent=11 // pred_region
        _
      $region52: #{molgan_discriminator.1} parent=11 // pred_fallthru
        _
      // Predicated region
      $region53: #{molgan_discriminator.1} parent=11 // pred_check
        %p397 = pneg %p305
      $region54: #{molgan_discriminator.1} parent=11 // pred_check_branch
        %399 = sbr.rel (%p397) target = $region56
      $region55: #{molgan_discriminator.1} parent=11 // pred_region
        _
      $region56: #{molgan_discriminator.1} parent=11 // pred_fallthru
        _
      // Predicated region
      $region57: #{molgan_discriminator.1} parent=11 // pred_check
        %p400 = pneg %p326
      $region58: #{molgan_discriminator.1} parent=11 // pred_check_branch
        %402 = sbr.rel (%p400) target = $region60
      $region59: #{molgan_discriminator.1} parent=11 // pred_region
        _
      $region60: #{molgan_discriminator.1} parent=11 // pred_fallthru
        _
    $region12: #{molgan_discriminator.1} parent=5 // pred_fallthru
      _
    %p403 = scmp.lt.s32.totalorder %s22, 2
    // Predicated region
    $region61: #{molgan_discriminator.1} parent=5 // pred_check
      %p404 = pneg %p403
    $region62: #{molgan_discriminator.1} parent=5 // pred_check_branch
      %406 = sbr.rel (%p404) target = $region64
    $region63: #{molgan_discriminator.1} parent=5 // pred_region
      // Predicated region
      $region65: #{molgan_discriminator.1} parent=63 // pred_check
        %p407 = pneg %p42
      $region66: #{molgan_discriminator.1} parent=63 // pred_check_branch
        %409 = sbr.rel (%p407) target = $region68
      $region67: #{molgan_discriminator.1} parent=63 // pred_region
        %s410 = smul.u32 8, %s22
        %p411 = scmp.lt.s32.totalorder %s410, 15
        %s412 = scalar_select %p411, %s410, 15
        %s413 = smul.addr %s412, 2
        %s414 = smul.addr %s413, 8
        %s415 = scalar_lea.vmem %s0, %s414
        %s416 = smul.u32 8, %s22
      $region68: #{molgan_discriminator.1} parent=63 // pred_fallthru
        _
      // Predicated region
      $region69: #{molgan_discriminator.1} parent=63 // pred_check
        %p417 = pneg %p68
      $region70: #{molgan_discriminator.1} parent=63 // pred_check_branch
        %419 = sbr.rel (%p417) target = $region72
      $region71: #{molgan_discriminator.1} parent=63 // pred_region
        %s420 = smul.u32 8, %s22
        %p421 = scmp.lt.s32.totalorder %s420, 15
        %s422 = scalar_select %p421, %s420, 15
        %s423 = smul.addr %s422, 2
        %s424 = smul.addr %s423, 8
        %s425 = scalar_lea.vmem %s1, %s424
        %s426 = smul.u32 8, %s22
      $region72: #{molgan_discriminator.1} parent=63 // pred_fallthru
        _
    $region64: #{molgan_discriminator.1} parent=5 // pred_fallthru
      _
    %p427 = scmp.le.s32.totalorder 1, %s22
    %p428 = scmp.lt.s32.totalorder %s22, 3
    %p429 = pnand %p427, %p428
    %p430 = pneg %p429
    // Predicated region
    $region73: #{molgan_discriminator.1} parent=5 // pred_check
      _
    $region74: #{molgan_discriminator.1} parent=5 // pred_check_branch
      %432 = sbr.rel (%p429) target = $region76
    $region75: #{molgan_discriminator.1} parent=5 // pred_region
      %s433 = ssub.s32 %s22, 1
      %s434 = smul.u32 8, %s27
      %p435 = scmp.lt.s32.totalorder %s434, 15
      %s436 = scalar_select %p435, %s434, 15
      %s437 = smul.addr %s436, 2
      %s438 = smul.addr %s437, 8
      %s439 = scalar_lea.vmem %s0, %s438
      %p440 = pneg %p48
      %p441 = pneg %p45
      %s442 = smul.u32 8, %s27
      %p443 = scmp.lt.s32.totalorder %s442, 15
      %s444 = scalar_select %p443, %s442, 15
      %s445 = smul.addr %s444, 2
      %s446 = smul.addr %s445, 8
      %s447 = scalar_lea.vmem %s1, %s446
      %p448 = pneg %p74
      %p449 = pneg %p71
      %p450 = pneg %p95
      %p451 = pneg %p92
      %p452 = pneg %p116
      %p453 = pneg %p113
      %p454 = pneg %p137
      %p455 = pneg %p134
      %p456 = pneg %p158
      %p457 = pneg %p155
      %p458 = pneg %p179
      %p459 = pneg %p176
      %p460 = pneg %p200
      %p461 = pneg %p197
      %p462 = pneg %p221
      %p463 = pneg %p218
      %p464 = pneg %p242
      %p465 = pneg %p239
      %p466 = pneg %p263
      %p467 = pneg %p260
      %p468 = pneg %p284
      %p469 = pneg %p281
      %p470 = pneg %p305
      %p471 = pneg %p302
      %p472 = pneg %p326
      %p473 = pneg %p323
      %p474 = pneg %p352
      %p475 = pneg %p349
      %p476 = scmp.lt.s32.totalorder %s27, 1
      %s477 = scalar_select %p476, %s27, 1
      %s478 = scalar_lea.vmem %s14, %s477
      %s479 = smul.u32 8, %s27
      %p480 = scmp.lt.s32.totalorder %s479, 15
      %s481 = scalar_select %p480, %s479, 15
      %s482 = smul.addr %s481, 2
      %s483 = smul.addr %s482, 8
      %s484 = scalar_lea.vmem %s0, %s483
      %s485 = smul.u32 8, %s27
      %s486 = smul.u32 8, %s27
      %p487 = scmp.lt.s32.totalorder %s486, 15
      %s488 = scalar_select %p487, %s486, 15
      %s489 = smul.addr %s488, 2
      %s490 = smul.addr %s489, 8
      %s491 = scalar_lea.vmem %s1, %s490
      %s492 = smul.u32 8, %s27
      %p493 = scmp.lt.s32.totalorder %s27, 1
      %s494 = scalar_select %p493, %s27, 1
      %s495 = scalar_lea.vmem %s14, %s494
      %v496 = vld [vmem:[%s484] sm:$0xff]
      %v497 = vld [vmem:[%s484 + $0x8] sm:$0xff]
      %v498 = vld [vmem:[%s484 + $0x10] sm:$0xff]
      %v499 = vld [vmem:[%s484 + $0x18] sm:$0xff]
      %v500 = vld [vmem:[%s484 + $0x20] sm:$0xff]
      %v501 = vld [vmem:[%s484 + $0x28] sm:$0xff]
      %v502 = vld [vmem:[%s484 + $0x30] sm:$0xff]
      %v503 = vld [vmem:[%s484 + $0x38] sm:$0xff]
      %v504 = vld [vmem:[%s484 + $0x40] sm:$0xff]
      %v505 = vld [vmem:[%s484 + $0x48] sm:$0xff]
      %v506 = vld [vmem:[%s484 + $0x50] sm:$0xff]
      %v507 = vld [vmem:[%s484 + $0x58] sm:$0xff]
      %v508 = vld [vmem:[%s484 + $0x60] sm:$0xff]
      %v509 = vld [vmem:[%s484 + $0x68] sm:$0xff]
      %v510 = vld [vmem:[%s484 + $0x70] sm:$0xff]
      %v511 = vld [vmem:[%s484 + $0x78] sm:$0xff]
      %v512 = vld [vmem:[%s491] sm:$0xff]
      %v513 = vld [vmem:[%s491 + $0x8] sm:$0xff]
      %v514 = vld [vmem:[%s491 + $0x10] sm:$0xff]
      %v515 = vld [vmem:[%s491 + $0x18] sm:$0xff]
      %v516 = vld [vmem:[%s491 + $0x20] sm:$0xff]
      %v517 = vld [vmem:[%s491 + $0x28] sm:$0xff]
      %v518 = vld [vmem:[%s491 + $0x30] sm:$0xff]
      %v519 = vld [vmem:[%s491 + $0x38] sm:$0xff]
      %v520 = vld [vmem:[%s491 + $0x40] sm:$0xff]
      %v521 = vld [vmem:[%s491 + $0x48] sm:$0xff]
      %v522 = vld [vmem:[%s491 + $0x50] sm:$0xff]
      %v523 = vld [vmem:[%s491 + $0x58] sm:$0xff]
      %v524 = vld [vmem:[%s491 + $0x60] sm:$0xff]
      %v525 = vld [vmem:[%s491 + $0x68] sm:$0xff]
      %v526 = vld [vmem:[%s491 + $0x70] sm:$0xff]
      %v527 = vld [vmem:[%s491 + $0x78] sm:$0xff]
      %v528 = vld [vmem:[%s2] sm:$0xff]
      %v529 = vld [vmem:[%s2 + $0x8] sm:$0xff]
      %v530 = vld [vmem:[%s3] sm:$0x3]
      %v532 = vperm.slane %v530, 0
      %v533 = vperm.slane %v530, 1
      %vm536 = vcmask 64512
      %v538 = vsel %vm536, %v496, 0
      %v541 = vsel %vm536, %v497, 0
      %v544 = vsel %vm536, %v498, 0
      %v547 = vsel %vm536, %v499, 0
      %v550 = vsel %vm536, %v500, 0
      %v553 = vsel %vm536, %v501, 0
      %v556 = vsel %vm536, %v502, 0
      %v559 = vsel %vm536, %v503, 0
      %v562 = vsel %vm536, %v504, 0
      %v565 = vsel %vm536, %v505, 0
      %v568 = vsel %vm536, %v506, 0
      %v571 = vsel %vm536, %v507, 0
      %v574 = vsel %vm536, %v508, 0
      %v577 = vsel %vm536, %v509, 0
      %v580 = vsel %vm536, %v510, 0
      %v583 = vsel %vm536, %v511, 0
      %585 = vmatpush.msra.mxu0 0.0
      %586 = vmatpush.msra.mxu0 0.0
      %587 = vmatpush.msra.mxu0 0.0
      %588 = vmatpush.msra.mxu0 0.0
      %589 = vmatpush.msra.mxu0 0.0
      %590 = vmatpush.msra.mxu0 0.0
      %591 = vmatpush.msra.mxu0 0.0
      %592 = vmatpush.msra.mxu0 0.0
      %593 = vmatpush.msra.mxu0 0.0
      %594 = vmatpush.msra.mxu0 0.0
      %595 = vmatpush.msra.mxu0 0.0
      %596 = vmatpush.msra.mxu0 0.0
      %597 = vmatpush.msra.mxu0 0.0
      %598 = vmatpush.msra.mxu0 0.0
      %599 = vmatpush.msra.mxu0 0.0
      %600 = vmatpush.msra.mxu0 %v528
      %601 = vmatmul.f32.gmra.mxu0 %v538
      %v602 = vpop.f32.mrf.mxu0
      %v603 = vadd.f32 %v532, %v602
      %604 = vmatmul.f32.gmra.mxu0 %v541
      %v605 = vpop.f32.mrf.mxu0
      %v606 = vadd.f32 %v532, %v605
      %607 = vmatmul.f32.gmra.mxu0 %v544
      %v608 = vpop.f32.mrf.mxu0
      %v609 = vadd.f32 %v532, %v608
      %610 = vmatmul.f32.gmra.mxu0 %v547
      %v611 = vpop.f32.mrf.mxu0
      %v612 = vadd.f32 %v532, %v611
      %613 = vmatmul.f32.gmra.mxu0 %v550
      %v614 = vpop.f32.mrf.mxu0
      %v615 = vadd.f32 %v532, %v614
      %616 = vmatmul.f32.gmra.mxu0 %v553
      %v617 = vpop.f32.mrf.mxu0
      %v618 = vadd.f32 %v532, %v617
      %619 = vmatmul.f32.gmra.mxu0 %v556
      %v620 = vpop.f32.mrf.mxu0
      %v621 = vadd.f32 %v532, %v620
      %622 = vmatmul.f32.gmra.mxu0 %v559
      %v623 = vpop.f32.mrf.mxu0
      %v624 = vadd.f32 %v532, %v623
      %625 = vmatmul.f32.gmra.mxu0 %v562
      %v626 = vpop.f32.mrf.mxu0
      %v627 = vadd.f32 %v532, %v626
      %628 = vmatmul.f32.gmra.mxu0 %v565
      %v629 = vpop.f32.mrf.mxu0
      %v630 = vadd.f32 %v532, %v629
      %631 = vmatmul.f32.gmra.mxu0 %v568
      %v632 = vpop.f32.mrf.mxu0
      %v633 = vadd.f32 %v532, %v632
      %634 = vmatmul.f32.gmra.mxu0 %v571
      %v635 = vpop.f32.mrf.mxu0
      %v636 = vadd.f32 %v532, %v635
      %637 = vmatmul.f32.gmra.mxu0 %v574
      %v638 = vpop.f32.mrf.mxu0
      %v639 = vadd.f32 %v532, %v638
      %640 = vmatmul.f32.gmra.mxu0 %v577
      %v641 = vpop.f32.mrf.mxu0
      %v642 = vadd.f32 %v532, %v641
      %643 = vmatmul.f32.gmra.mxu0 %v580
      %v644 = vpop.f32.mrf.mxu0
      %v645 = vadd.f32 %v532, %v644
      %646 = vmatmul.f32.gmra.mxu0 %v583
      %v647 = vpop.f32.mrf.mxu0
      %v648 = vadd.f32 %v532, %v647
      %649 = vdwg.mxu0
      %650 = vmatpush.msra.mxu0 0.0
      %651 = vmatpush.msra.mxu0 0.0
      %652 = vmatpush.msra.mxu0 0.0
      %653 = vmatpush.msra.mxu0 0.0
      %654 = vmatpush.msra.mxu0 0.0
      %655 = vmatpush.msra.mxu0 0.0
      %656 = vmatpush.msra.mxu0 0.0
      %657 = vmatpush.msra.mxu0 0.0
      %658 = vmatpush.msra.mxu0 0.0
      %659 = vmatpush.msra.mxu0 0.0
      %660 = vmatpush.msra.mxu0 0.0
      %661 = vmatpush.msra.mxu0 0.0
      %662 = vmatpush.msra.mxu0 0.0
      %663 = vmatpush.msra.mxu0 0.0
      %664 = vmatpush.msra.mxu0 0.0
      %665 = vmatpush.msra.mxu0 %v529
      %666 = vmatmul.f32.gmra.mxu0 %v538
      %v667 = vpop.f32.mrf.mxu0
      %v668 = vadd.f32 %v533, %v667
      %669 = vmatmul.f32.gmra.mxu0 %v541
      %v670 = vpop.f32.mrf.mxu0
      %v671 = vadd.f32 %v533, %v670
      %672 = vmatmul.f32.gmra.mxu0 %v544
      %v673 = vpop.f32.mrf.mxu0
      %v674 = vadd.f32 %v533, %v673
      %675 = vmatmul.f32.gmra.mxu0 %v547
      %v676 = vpop.f32.mrf.mxu0
      %v677 = vadd.f32 %v533, %v676
      %678 = vmatmul.f32.gmra.mxu0 %v550
      %v679 = vpop.f32.mrf.mxu0
      %v680 = vadd.f32 %v533, %v679
      %681 = vmatmul.f32.gmra.mxu0 %v553
      %v682 = vpop.f32.mrf.mxu0
      %v683 = vadd.f32 %v533, %v682
      %684 = vmatmul.f32.gmra.mxu0 %v556
      %v685 = vpop.f32.mrf.mxu0
      %v686 = vadd.f32 %v533, %v685
      %687 = vmatmul.f32.gmra.mxu0 %v559
      %v688 = vpop.f32.mrf.mxu0
      %v689 = vadd.f32 %v533, %v688
      %690 = vmatmul.f32.gmra.mxu0 %v562
      %v691 = vpop.f32.mrf.mxu0
      %v692 = vadd.f32 %v533, %v691
      %693 = vmatmul.f32.gmra.mxu0 %v565
      %v694 = vpop.f32.mrf.mxu0
      %v695 = vadd.f32 %v533, %v694
      %696 = vmatmul.f32.gmra.mxu0 %v568
      %v697 = vpop.f32.mrf.mxu0
      %v698 = vadd.f32 %v533, %v697
      %699 = vmatmul.f32.gmra.mxu0 %v571
      %v700 = vpop.f32.mrf.mxu0
      %v701 = vadd.f32 %v533, %v700
      %702 = vmatmul.f32.gmra.mxu0 %v574
      %v703 = vpop.f32.mrf.mxu0
      %v704 = vadd.f32 %v533, %v703
      %705 = vmatmul.f32.gmra.mxu0 %v577
      %v706 = vpop.f32.mrf.mxu0
      %v707 = vadd.f32 %v533, %v706
      %708 = vmatmul.f32.gmra.mxu0 %v580
      %v709 = vpop.f32.mrf.mxu0
      %v710 = vadd.f32 %v533, %v709
      %711 = vmatmul.f32.gmra.mxu0 %v583
      %v712 = vpop.f32.mrf.mxu0
      %v713 = vadd.f32 %v533, %v712
      %714 = vdwg.mxu0
      %vm715 = vcmask 130048
      %v717 = vsel %vm715, %v512, 0
      %v720 = vsel %vm715, %v513, 0
      %722 = vmatpush.msra.mxu0 0.0
      %723 = vmatpush.msra.mxu0 0.0
      %724 = vmatpush.msra.mxu0 0.0
      %725 = vmatpush.msra.mxu0 0.0
      %726 = vmatpush.msra.mxu0 0.0
      %727 = vmatpush.msra.mxu0 0.0
      %728 = vmatpush.msra.mxu0 0.0
      %729 = vmatpush.msra.mxu0 0.0
      %730 = vmatpush.msra.mxu0 0.0
      %731 = vmatpush.msra.mxu0 0.0
      %732 = vmatpush.msra.mxu0 0.0
      %733 = vmatpush.msra.mxu0 0.0
      %734 = vmatpush.msra.mxu0 0.0
      %735 = vmatpush.msra.mxu0 0.0
      %736 = vmatpush.msra.mxu0 %v606
      %737 = vmatpush.msra.mxu0 %v603
      %738 = vmatmul.f32.gmra.mxu0 %v717
      %v739 = vpop.f32.mrf.mxu0
      %v740 = vadd.f32 0.0, %v739
      %741 = vmatmul.f32.gmra.mxu0 %v720
      %v742 = vpop.f32.mrf.mxu0
      %v743 = vadd.f32 0.0, %v742
      %744 = vdwg.mxu0
      %v746 = vsel %vm715, %v514, 0
      %v749 = vsel %vm715, %v515, 0
      %751 = vmatpush.msra.mxu0 0.0
      %752 = vmatpush.msra.mxu0 0.0
      %753 = vmatpush.msra.mxu0 0.0
      %754 = vmatpush.msra.mxu0 0.0
      %755 = vmatpush.msra.mxu0 0.0
      %756 = vmatpush.msra.mxu0 0.0
      %757 = vmatpush.msra.mxu0 0.0
      %758 = vmatpush.msra.mxu0 0.0
      %759 = vmatpush.msra.mxu0 0.0
      %760 = vmatpush.msra.mxu0 0.0
      %761 = vmatpush.msra.mxu0 0.0
      %762 = vmatpush.msra.mxu0 0.0
      %763 = vmatpush.msra.mxu0 0.0
      %764 = vmatpush.msra.mxu0 0.0
      %765 = vmatpush.msra.mxu0 %v612
      %766 = vmatpush.msra.mxu0 %v609
      %767 = vmatmul.f32.gmra.mxu0 %v746
      %v768 = vpop.f32.mrf.mxu0
      %v769 = vadd.f32 0.0, %v768
      %770 = vmatmul.f32.gmra.mxu0 %v749
      %v771 = vpop.f32.mrf.mxu0
      %v772 = vadd.f32 0.0, %v771
      %773 = vdwg.mxu0
      %v775 = vsel %vm715, %v516, 0
      %v778 = vsel %vm715, %v517, 0
      %780 = vmatpush.msra.mxu0 0.0
      %781 = vmatpush.msra.mxu0 0.0
      %782 = vmatpush.msra.mxu0 0.0
      %783 = vmatpush.msra.mxu0 0.0
      %784 = vmatpush.msra.mxu0 0.0
      %785 = vmatpush.msra.mxu0 0.0
      %786 = vmatpush.msra.mxu0 0.0
      %787 = vmatpush.msra.mxu0 0.0
      %788 = vmatpush.msra.mxu0 0.0
      %789 = vmatpush.msra.mxu0 0.0
      %790 = vmatpush.msra.mxu0 0.0
      %791 = vmatpush.msra.mxu0 0.0
      %792 = vmatpush.msra.mxu0 0.0
      %793 = vmatpush.msra.mxu0 0.0
      %794 = vmatpush.msra.mxu0 %v618
      %795 = vmatpush.msra.mxu0 %v615
      %796 = vmatmul.f32.gmra.mxu0 %v775
      %v797 = vpop.f32.mrf.mxu0
      %v798 = vadd.f32 0.0, %v797
      %799 = vmatmul.f32.gmra.mxu0 %v778
      %v800 = vpop.f32.mrf.mxu0
      %v801 = vadd.f32 0.0, %v800
      %802 = vdwg.mxu0
      %v804 = vsel %vm715, %v518, 0
      %v807 = vsel %vm715, %v519, 0
      %809 = vmatpush.msra.mxu0 0.0
      %810 = vmatpush.msra.mxu0 0.0
      %811 = vmatpush.msra.mxu0 0.0
      %812 = vmatpush.msra.mxu0 0.0
      %813 = vmatpush.msra.mxu0 0.0
      %814 = vmatpush.msra.mxu0 0.0
      %815 = vmatpush.msra.mxu0 0.0
      %816 = vmatpush.msra.mxu0 0.0
      %817 = vmatpush.msra.mxu0 0.0
      %818 = vmatpush.msra.mxu0 0.0
      %819 = vmatpush.msra.mxu0 0.0
      %820 = vmatpush.msra.mxu0 0.0
      %821 = vmatpush.msra.mxu0 0.0
      %822 = vmatpush.msra.mxu0 0.0
      %823 = vmatpush.msra.mxu0 %v624
      %824 = vmatpush.msra.mxu0 %v621
      %825 = vmatmul.f32.gmra.mxu0 %v804
      %v826 = vpop.f32.mrf.mxu0
      %v827 = vadd.f32 0.0, %v826
      %828 = vmatmul.f32.gmra.mxu0 %v807
      %v829 = vpop.f32.mrf.mxu0
      %v830 = vadd.f32 0.0, %v829
      %831 = vdwg.mxu0
      %v833 = vsel %vm715, %v520, 0
      %v836 = vsel %vm715, %v521, 0
      %838 = vmatpush.msra.mxu0 0.0
      %839 = vmatpush.msra.mxu0 0.0
      %840 = vmatpush.msra.mxu0 0.0
      %841 = vmatpush.msra.mxu0 0.0
      %842 = vmatpush.msra.mxu0 0.0
      %843 = vmatpush.msra.mxu0 0.0
      %844 = vmatpush.msra.mxu0 0.0
      %845 = vmatpush.msra.mxu0 0.0
      %846 = vmatpush.msra.mxu0 0.0
      %847 = vmatpush.msra.mxu0 0.0
      %848 = vmatpush.msra.mxu0 0.0
      %849 = vmatpush.msra.mxu0 0.0
      %850 = vmatpush.msra.mxu0 0.0
      %851 = vmatpush.msra.mxu0 0.0
      %852 = vmatpush.msra.mxu0 %v630
      %853 = vmatpush.msra.mxu0 %v627
      %854 = vmatmul.f32.gmra.mxu0 %v833
      %v855 = vpop.f32.mrf.mxu0
      %v856 = vadd.f32 0.0, %v855
      %857 = vmatmul.f32.gmra.mxu0 %v836
      %v858 = vpop.f32.mrf.mxu0
      %v859 = vadd.f32 0.0, %v858
      %860 = vdwg.mxu0
      %v862 = vsel %vm715, %v522, 0
      %v865 = vsel %vm715, %v523, 0
      %867 = vmatpush.msra.mxu0 0.0
      %868 = vmatpush.msra.mxu0 0.0
      %869 = vmatpush.msra.mxu0 0.0
      %870 = vmatpush.msra.mxu0 0.0
      %871 = vmatpush.msra.mxu0 0.0
      %872 = vmatpush.msra.mxu0 0.0
      %873 = vmatpush.msra.mxu0 0.0
      %874 = vmatpush.msra.mxu0 0.0
      %875 = vmatpush.msra.mxu0 0.0
      %876 = vmatpush.msra.mxu0 0.0
      %877 = vmatpush.msra.mxu0 0.0
      %878 = vmatpush.msra.mxu0 0.0
      %879 = vmatpush.msra.mxu0 0.0
      %880 = vmatpush.msra.mxu0 0.0
      %881 = vmatpush.msra.mxu0 %v636
      %882 = vmatpush.msra.mxu0 %v633
      %883 = vmatmul.f32.gmra.mxu0 %v862
      %v884 = vpop.f32.mrf.mxu0
      %v885 = vadd.f32 0.0, %v884
      %886 = vmatmul.f32.gmra.mxu0 %v865
      %v887 = vpop.f32.mrf.mxu0
      %v888 = vadd.f32 0.0, %v887
      %889 = vdwg.mxu0
      %v891 = vsel %vm715, %v524, 0
      %v894 = vsel %vm715, %v525, 0
      %896 = vmatpush.msra.mxu0 0.0
      %897 = vmatpush.msra.mxu0 0.0
      %898 = vmatpush.msra.mxu0 0.0
      %899 = vmatpush.msra.mxu0 0.0
      %900 = vmatpush.msra.mxu0 0.0
      %901 = vmatpush.msra.mxu0 0.0
      %902 = vmatpush.msra.mxu0 0.0
      %903 = vmatpush.msra.mxu0 0.0
      %904 = vmatpush.msra.mxu0 0.0
      %905 = vmatpush.msra.mxu0 0.0
      %906 = vmatpush.msra.mxu0 0.0
      %907 = vmatpush.msra.mxu0 0.0
      %908 = vmatpush.msra.mxu0 0.0
      %909 = vmatpush.msra.mxu0 0.0
      %910 = vmatpush.msra.mxu0 %v642
      %911 = vmatpush.msra.mxu0 %v639
      %912 = vmatmul.f32.gmra.mxu0 %v891
      %v913 = vpop.f32.mrf.mxu0
      %v914 = vadd.f32 0.0, %v913
      %915 = vmatmul.f32.gmra.mxu0 %v894
      %v916 = vpop.f32.mrf.mxu0
      %v917 = vadd.f32 0.0, %v916
      %918 = vdwg.mxu0
      %v920 = vsel %vm715, %v526, 0
      %v923 = vsel %vm715, %v527, 0
      %925 = vmatpush.msra.mxu0 0.0
      %926 = vmatpush.msra.mxu0 0.0
      %927 = vmatpush.msra.mxu0 0.0
      %928 = vmatpush.msra.mxu0 0.0
      %929 = vmatpush.msra.mxu0 0.0
      %930 = vmatpush.msra.mxu0 0.0
      %931 = vmatpush.msra.mxu0 0.0
      %932 = vmatpush.msra.mxu0 0.0
      %933 = vmatpush.msra.mxu0 0.0
      %934 = vmatpush.msra.mxu0 0.0
      %935 = vmatpush.msra.mxu0 0.0
      %936 = vmatpush.msra.mxu0 0.0
      %937 = vmatpush.msra.mxu0 0.0
      %938 = vmatpush.msra.mxu0 0.0
      %939 = vmatpush.msra.mxu0 %v648
      %940 = vmatpush.msra.mxu0 %v645
      %941 = vmatmul.f32.gmra.mxu0 %v920
      %v942 = vpop.f32.mrf.mxu0
      %v943 = vadd.f32 0.0, %v942
      %944 = vmatmul.f32.gmra.mxu0 %v923
      %v945 = vpop.f32.mrf.mxu0
      %v946 = vadd.f32 0.0, %v945
      %947 = vdwg.mxu0
      %v948 = vadd.f32 %v740, %v668
      %v949 = vadd.f32 %v743, %v671
      %v950 = vadd.f32 %v769, %v674
      %v951 = vadd.f32 %v772, %v677
      %v952 = vadd.f32 %v798, %v680
      %v953 = vadd.f32 %v801, %v683
      %v954 = vadd.f32 %v827, %v686
      %v955 = vadd.f32 %v830, %v689
      %v956 = vadd.f32 %v856, %v692
      %v957 = vadd.f32 %v859, %v695
      %v958 = vadd.f32 %v885, %v698
      %v959 = vadd.f32 %v888, %v701
      %v960 = vadd.f32 %v914, %v704
      %v961 = vadd.f32 %v917, %v707
      %v962 = vadd.f32 %v943, %v710
      %v963 = vadd.f32 %v946, %v713
      %v964 = vld [vmem:[%s4] sm:$0xff]
      %v965 = vld [vmem:[%s4 + $0x8] sm:$0xff]
      %v966 = vld [vmem:[%s4 + $0x10] sm:$0xff]
      %v967 = vld [vmem:[%s4 + $0x18] sm:$0xff]
      %v968 = vld [vmem:[%s4 + $0x20] sm:$0xff]
      %v969 = vld [vmem:[%s4 + $0x28] sm:$0xff]
      %v970 = vld [vmem:[%s4 + $0x30] sm:$0xff]
      %v971 = vld [vmem:[%s4 + $0x38] sm:$0xff]
      %v972 = vld [vmem:[%s4 + $0x40] sm:$0xff]
      %v973 = vld [vmem:[%s4 + $0x48] sm:$0xff]
      %v974 = vld [vmem:[%s4 + $0x50] sm:$0xff]
      %v975 = vld [vmem:[%s4 + $0x58] sm:$0xff]
      %v976 = vld [vmem:[%s4 + $0x60] sm:$0xff]
      %v977 = vld [vmem:[%s4 + $0x68] sm:$0xff]
      %v978 = vld [vmem:[%s4 + $0x70] sm:$0xff]
      %v979 = vld [vmem:[%s4 + $0x78] sm:$0xff]
      %v980 = vld [vmem:[%s5] sm:$0xff]
      %981 = vmatpush.msra.mxu0 0.0
      %982 = vmatpush.msra.mxu0 0.0
      %983 = vmatpush.msra.mxu0 0.0
      %984 = vmatpush.msra.mxu0 0.0
      %985 = vmatpush.msra.mxu0 0.0
      %986 = vmatpush.msra.mxu0 0.0
      %987 = vmatpush.msra.mxu0 0.0
      %988 = vmatpush.msra.mxu0 0.0
      %989 = vmatpush.msra.mxu0 0.0
      %990 = vmatpush.msra.mxu0 0.0
      %991 = vmatpush.msra.mxu0 0.0
      %992 = vmatpush.msra.mxu0 0.0
      %993 = vmatpush.msra.mxu0 0.0
      %994 = vmatpush.msra.mxu0 0.0
      %995 = vmatpush.msra.mxu0 0.0
      %996 = vmatpush.msra.mxu0 %v980
      %997 = vmatmul.f32.gmra.mxu0 %v538
      %v998 = vpop.f32.mrf.mxu0
      %v999 = vadd.f32 0.0, %v998
      %1000 = vmatmul.f32.gmra.mxu0 %v541
      %v1001 = vpop.f32.mrf.mxu0
      %v1002 = vadd.f32 0.0, %v1001
      %1003 = vmatmul.f32.gmra.mxu0 %v544
      %v1004 = vpop.f32.mrf.mxu0
      %v1005 = vadd.f32 0.0, %v1004
      %1006 = vmatmul.f32.gmra.mxu0 %v547
      %v1007 = vpop.f32.mrf.mxu0
      %v1008 = vadd.f32 0.0, %v1007
      %1009 = vmatmul.f32.gmra.mxu0 %v550
      %v1010 = vpop.f32.mrf.mxu0
      %v1011 = vadd.f32 0.0, %v1010
      %1012 = vmatmul.f32.gmra.mxu0 %v553
      %v1013 = vpop.f32.mrf.mxu0
      %v1014 = vadd.f32 0.0, %v1013
      %1015 = vmatmul.f32.gmra.mxu0 %v556
      %v1016 = vpop.f32.mrf.mxu0
      %v1017 = vadd.f32 0.0, %v1016
      %1018 = vmatmul.f32.gmra.mxu0 %v559
      %v1019 = vpop.f32.mrf.mxu0
      %v1020 = vadd.f32 0.0, %v1019
      %1021 = vmatmul.f32.gmra.mxu0 %v562
      %v1022 = vpop.f32.mrf.mxu0
      %v1023 = vadd.f32 0.0, %v1022
      %1024 = vmatmul.f32.gmra.mxu0 %v565
      %v1025 = vpop.f32.mrf.mxu0
      %v1026 = vadd.f32 0.0, %v1025
      %1027 = vmatmul.f32.gmra.mxu0 %v568
      %v1028 = vpop.f32.mrf.mxu0
      %v1029 = vadd.f32 0.0, %v1028
      %1030 = vmatmul.f32.gmra.mxu0 %v571
      %v1031 = vpop.f32.mrf.mxu0
      %v1032 = vadd.f32 0.0, %v1031
      %1033 = vmatmul.f32.gmra.mxu0 %v574
      %v1034 = vpop.f32.mrf.mxu0
      %v1035 = vadd.f32 0.0, %v1034
      %1036 = vmatmul.f32.gmra.mxu0 %v577
      %v1037 = vpop.f32.mrf.mxu0
      %v1038 = vadd.f32 0.0, %v1037
      %1039 = vmatmul.f32.gmra.mxu0 %v580
      %v1040 = vpop.f32.mrf.mxu0
      %v1041 = vadd.f32 0.0, %v1040
      %1042 = vmatmul.f32.gmra.mxu0 %v583
      %v1043 = vpop.f32.mrf.mxu0
      %v1044 = vadd.f32 0.0, %v1043
      %1045 = vdwg.mxu0
      %1046 = vmatpush.msra.mxu0 %v979
      %1047 = vmatpush.msra.mxu0 %v978
      %1048 = vmatpush.msra.mxu0 %v977
      %1049 = vmatpush.msra.mxu0 %v976
      %1050 = vmatpush.msra.mxu0 %v975
      %1051 = vmatpush.msra.mxu0 %v974
      %1052 = vmatpush.msra.mxu0 %v973
      %1053 = vmatpush.msra.mxu0 %v972
      %1054 = vmatpush.msra.mxu0 %v971
      %1055 = vmatpush.msra.mxu0 %v970
      %1056 = vmatpush.msra.mxu0 %v969
      %1057 = vmatpush.msra.mxu0 %v968
      %1058 = vmatpush.msra.mxu0 %v967
      %1059 = vmatpush.msra.mxu0 %v966
      %1060 = vmatpush.msra.mxu0 %v965
      %1061 = vmatpush.msra.mxu0 %v964
      %1062 = vmatmul.f32.gmra.mxu0 %v948
      %v1063 = vpop.f32.mrf.mxu0
      %v1064 = vadd.f32 %v999, %v1063
      %1065 = vmatmul.f32.gmra.mxu0 %v949
      %v1066 = vpop.f32.mrf.mxu0
      %v1067 = vadd.f32 %v1002, %v1066
      %1068 = vmatmul.f32.gmra.mxu0 %v950
      %v1069 = vpop.f32.mrf.mxu0
      %v1070 = vadd.f32 %v1005, %v1069
      %1071 = vmatmul.f32.gmra.mxu0 %v951
      %v1072 = vpop.f32.mrf.mxu0
      %v1073 = vadd.f32 %v1008, %v1072
      %1074 = vmatmul.f32.gmra.mxu0 %v952
      %v1075 = vpop.f32.mrf.mxu0
      %v1076 = vadd.f32 %v1011, %v1075
      %1077 = vmatmul.f32.gmra.mxu0 %v953
      %v1078 = vpop.f32.mrf.mxu0
      %v1079 = vadd.f32 %v1014, %v1078
      %1080 = vmatmul.f32.gmra.mxu0 %v954
      %v1081 = vpop.f32.mrf.mxu0
      %v1082 = vadd.f32 %v1017, %v1081
      %1083 = vmatmul.f32.gmra.mxu0 %v955
      %v1084 = vpop.f32.mrf.mxu0
      %v1085 = vadd.f32 %v1020, %v1084
      %1086 = vmatmul.f32.gmra.mxu0 %v956
      %v1087 = vpop.f32.mrf.mxu0
      %v1088 = vadd.f32 %v1023, %v1087
      %1089 = vmatmul.f32.gmra.mxu0 %v957
      %v1090 = vpop.f32.mrf.mxu0
      %v1091 = vadd.f32 %v1026, %v1090
      %1092 = vmatmul.f32.gmra.mxu0 %v958
      %v1093 = vpop.f32.mrf.mxu0
      %v1094 = vadd.f32 %v1029, %v1093
      %1095 = vmatmul.f32.gmra.mxu0 %v959
      %v1096 = vpop.f32.mrf.mxu0
      %v1097 = vadd.f32 %v1032, %v1096
      %1098 = vmatmul.f32.gmra.mxu0 %v960
      %v1099 = vpop.f32.mrf.mxu0
      %v1100 = vadd.f32 %v1035, %v1099
      %1101 = vmatmul.f32.gmra.mxu0 %v961
      %v1102 = vpop.f32.mrf.mxu0
      %v1103 = vadd.f32 %v1038, %v1102
      %1104 = vmatmul.f32.gmra.mxu0 %v962
      %v1105 = vpop.f32.mrf.mxu0
      %v1106 = vadd.f32 %v1041, %v1105
      %1107 = vmatmul.f32.gmra.mxu0 %v963
      %v1108 = vpop.f32.mrf.mxu0
      %v1109 = vadd.f32 %v1044, %v1108
      %1110 = vdwg.mxu0
      %v1111 = vld [vmem:[%s6] sm:$0x1]
      %v1113 = vperm.slane %v1111, 0
      %v1115 = vadd.f32 %v1064, %v1113
      %v1116 = vadd.f32 %v1067, %v1113
      %v1117 = vadd.f32 %v1070, %v1113
      %v1118 = vadd.f32 %v1073, %v1113
      %v1119 = vadd.f32 %v1076, %v1113
      %v1120 = vadd.f32 %v1079, %v1113
      %v1121 = vadd.f32 %v1082, %v1113
      %v1122 = vadd.f32 %v1085, %v1113
      %v1123 = vadd.f32 %v1088, %v1113
      %v1124 = vadd.f32 %v1091, %v1113
      %v1125 = vadd.f32 %v1094, %v1113
      %v1126 = vadd.f32 %v1097, %v1113
      %v1127 = vadd.f32 %v1100, %v1113
      %v1128 = vadd.f32 %v1103, %v1113
      %v1129 = vadd.f32 %v1106, %v1113
      %v1130 = vadd.f32 %v1109, %v1113
      %1131 = vmatpush.msra.mxu0 0.0
      %1132 = vmatpush.msra.mxu0 0.0
      %1133 = vmatpush.msra.mxu0 0.0
      %1134 = vmatpush.msra.mxu0 0.0
      %1135 = vmatpush.msra.mxu0 0.0
      %1136 = vmatpush.msra.mxu0 0.0
      %1137 = vmatpush.msra.mxu0 0.0
      %1138 = vmatpush.msra.mxu0 0.0
      %1139 = vmatpush.msra.mxu0 0.0
      %1140 = vmatpush.msra.mxu0 0.0
      %1141 = vmatpush.msra.mxu0 0.0
      %1142 = vmatpush.msra.mxu0 0.0
      %1143 = vmatpush.msra.mxu0 0.0
      %1144 = vmatpush.msra.mxu0 0.0
      %1145 = vmatpush.msra.mxu0 %v1116
      %1146 = vmatpush.msra.mxu0 %v1115
      %1147 = vmatmul.f32.gmra.mxu0 %v717
      %v1148 = vpop.f32.mrf.mxu0
      %v1149 = vadd.f32 0.0, %v1148
      %1150 = vmatmul.f32.gmra.mxu0 %v720
      %v1151 = vpop.f32.mrf.mxu0
      %v1152 = vadd.f32 0.0, %v1151
      %1153 = vdwg.mxu0
      %1154 = vmatpush.msra.mxu0 0.0
      %1155 = vmatpush.msra.mxu0 0.0
      %1156 = vmatpush.msra.mxu0 0.0
      %1157 = vmatpush.msra.mxu0 0.0
      %1158 = vmatpush.msra.mxu0 0.0
      %1159 = vmatpush.msra.mxu0 0.0
      %1160 = vmatpush.msra.mxu0 0.0
      %1161 = vmatpush.msra.mxu0 0.0
      %1162 = vmatpush.msra.mxu0 0.0
      %1163 = vmatpush.msra.mxu0 0.0
      %1164 = vmatpush.msra.mxu0 0.0
      %1165 = vmatpush.msra.mxu0 0.0
      %1166 = vmatpush.msra.mxu0 0.0
      %1167 = vmatpush.msra.mxu0 0.0
      %1168 = vmatpush.msra.mxu0 %v1118
      %1169 = vmatpush.msra.mxu0 %v1117
      %1170 = vmatmul.f32.gmra.mxu0 %v746
      %v1171 = vpop.f32.mrf.mxu0
      %v1172 = vadd.f32 0.0, %v1171
      %1173 = vmatmul.f32.gmra.mxu0 %v749
      %v1174 = vpop.f32.mrf.mxu0
      %v1175 = vadd.f32 0.0, %v1174
      %1176 = vdwg.mxu0
      %1177 = vmatpush.msra.mxu0 0.0
      %1178 = vmatpush.msra.mxu0 0.0
      %1179 = vmatpush.msra.mxu0 0.0
      %1180 = vmatpush.msra.mxu0 0.0
      %1181 = vmatpush.msra.mxu0 0.0
      %1182 = vmatpush.msra.mxu0 0.0
      %1183 = vmatpush.msra.mxu0 0.0
      %1184 = vmatpush.msra.mxu0 0.0
      %1185 = vmatpush.msra.mxu0 0.0
      %1186 = vmatpush.msra.mxu0 0.0
      %1187 = vmatpush.msra.mxu0 0.0
      %1188 = vmatpush.msra.mxu0 0.0
      %1189 = vmatpush.msra.mxu0 0.0
      %1190 = vmatpush.msra.mxu0 0.0
      %1191 = vmatpush.msra.mxu0 %v1120
      %1192 = vmatpush.msra.mxu0 %v1119
      %1193 = vmatmul.f32.gmra.mxu0 %v775
      %v1194 = vpop.f32.mrf.mxu0
      %v1195 = vadd.f32 0.0, %v1194
      %1196 = vmatmul.f32.gmra.mxu0 %v778
      %v1197 = vpop.f32.mrf.mxu0
      %v1198 = vadd.f32 0.0, %v1197
      %1199 = vdwg.mxu0
      %1200 = vmatpush.msra.mxu0 0.0
      %1201 = vmatpush.msra.mxu0 0.0
      %1202 = vmatpush.msra.mxu0 0.0
      %1203 = vmatpush.msra.mxu0 0.0
      %1204 = vmatpush.msra.mxu0 0.0
      %1205 = vmatpush.msra.mxu0 0.0
      %1206 = vmatpush.msra.mxu0 0.0
      %1207 = vmatpush.msra.mxu0 0.0
      %1208 = vmatpush.msra.mxu0 0.0
      %1209 = vmatpush.msra.mxu0 0.0
      %1210 = vmatpush.msra.mxu0 0.0
      %1211 = vmatpush.msra.mxu0 0.0
      %1212 = vmatpush.msra.mxu0 0.0
      %1213 = vmatpush.msra.mxu0 0.0
      %1214 = vmatpush.msra.mxu0 %v1122
      %1215 = vmatpush.msra.mxu0 %v1121
      %1216 = vmatmul.f32.gmra.mxu0 %v804
      %v1217 = vpop.f32.mrf.mxu0
      %v1218 = vadd.f32 0.0, %v1217
      %1219 = vmatmul.f32.gmra.mxu0 %v807
      %v1220 = vpop.f32.mrf.mxu0
      %v1221 = vadd.f32 0.0, %v1220
      %1222 = vdwg.mxu0
      %1223 = vmatpush.msra.mxu0 0.0
      %1224 = vmatpush.msra.mxu0 0.0
      %1225 = vmatpush.msra.mxu0 0.0
      %1226 = vmatpush.msra.mxu0 0.0
      %1227 = vmatpush.msra.mxu0 0.0
      %1228 = vmatpush.msra.mxu0 0.0
      %1229 = vmatpush.msra.mxu0 0.0
      %1230 = vmatpush.msra.mxu0 0.0
      %1231 = vmatpush.msra.mxu0 0.0
      %1232 = vmatpush.msra.mxu0 0.0
      %1233 = vmatpush.msra.mxu0 0.0
      %1234 = vmatpush.msra.mxu0 0.0
      %1235 = vmatpush.msra.mxu0 0.0
      %1236 = vmatpush.msra.mxu0 0.0
      %1237 = vmatpush.msra.mxu0 %v1124
      %1238 = vmatpush.msra.mxu0 %v1123
      %1239 = vmatmul.f32.gmra.mxu0 %v833
      %v1240 = vpop.f32.mrf.mxu0
      %v1241 = vadd.f32 0.0, %v1240
      %1242 = vmatmul.f32.gmra.mxu0 %v836
      %v1243 = vpop.f32.mrf.mxu0
      %v1244 = vadd.f32 0.0, %v1243
      %1245 = vdwg.mxu0
      %1246 = vmatpush.msra.mxu0 0.0
      %1247 = vmatpush.msra.mxu0 0.0
      %1248 = vmatpush.msra.mxu0 0.0
      %1249 = vmatpush.msra.mxu0 0.0
      %1250 = vmatpush.msra.mxu0 0.0
      %1251 = vmatpush.msra.mxu0 0.0
      %1252 = vmatpush.msra.mxu0 0.0
      %1253 = vmatpush.msra.mxu0 0.0
      %1254 = vmatpush.msra.mxu0 0.0
      %1255 = vmatpush.msra.mxu0 0.0
      %1256 = vmatpush.msra.mxu0 0.0
      %1257 = vmatpush.msra.mxu0 0.0
      %1258 = vmatpush.msra.mxu0 0.0
      %1259 = vmatpush.msra.mxu0 0.0
      %1260 = vmatpush.msra.mxu0 %v1126
      %1261 = vmatpush.msra.mxu0 %v1125
      %1262 = vmatmul.f32.gmra.mxu0 %v862
      %v1263 = vpop.f32.mrf.mxu0
      %v1264 = vadd.f32 0.0, %v1263
      %1265 = vmatmul.f32.gmra.mxu0 %v865
      %v1266 = vpop.f32.mrf.mxu0
      %v1267 = vadd.f32 0.0, %v1266
      %1268 = vdwg.mxu0
      %1269 = vmatpush.msra.mxu0 0.0
      %1270 = vmatpush.msra.mxu0 0.0
      %1271 = vmatpush.msra.mxu0 0.0
      %1272 = vmatpush.msra.mxu0 0.0
      %1273 = vmatpush.msra.mxu0 0.0
      %1274 = vmatpush.msra.mxu0 0.0
      %1275 = vmatpush.msra.mxu0 0.0
      %1276 = vmatpush.msra.mxu0 0.0
      %1277 = vmatpush.msra.mxu0 0.0
      %1278 = vmatpush.msra.mxu0 0.0
      %1279 = vmatpush.msra.mxu0 0.0
      %1280 = vmatpush.msra.mxu0 0.0
      %1281 = vmatpush.msra.mxu0 0.0
      %1282 = vmatpush.msra.mxu0 0.0
      %1283 = vmatpush.msra.mxu0 %v1128
      %1284 = vmatpush.msra.mxu0 %v1127
      %1285 = vmatmul.f32.gmra.mxu0 %v891
      %v1286 = vpop.f32.mrf.mxu0
      %v1287 = vadd.f32 0.0, %v1286
      %1288 = vmatmul.f32.gmra.mxu0 %v894
      %v1289 = vpop.f32.mrf.mxu0
      %v1290 = vadd.f32 0.0, %v1289
      %1291 = vdwg.mxu0
      %1292 = vmatpush.msra.mxu0 0.0
      %1293 = vmatpush.msra.mxu0 0.0
      %1294 = vmatpush.msra.mxu0 0.0
      %1295 = vmatpush.msra.mxu0 0.0
      %1296 = vmatpush.msra.mxu0 0.0
      %1297 = vmatpush.msra.mxu0 0.0
      %1298 = vmatpush.msra.mxu0 0.0
      %1299 = vmatpush.msra.mxu0 0.0
      %1300 = vmatpush.msra.mxu0 0.0
      %1301 = vmatpush.msra.mxu0 0.0
      %1302 = vmatpush.msra.mxu0 0.0
      %1303 = vmatpush.msra.mxu0 0.0
      %1304 = vmatpush.msra.mxu0 0.0
      %1305 = vmatpush.msra.mxu0 0.0
      %1306 = vmatpush.msra.mxu0 %v1130
      %1307 = vmatpush.msra.mxu0 %v1129
      %1308 = vmatmul.f32.gmra.mxu0 %v920
      %v1309 = vpop.f32.mrf.mxu0
      %v1310 = vadd.f32 0.0, %v1309
      %1311 = vmatmul.f32.gmra.mxu0 %v923
      %v1312 = vpop.f32.mrf.mxu0
      %v1313 = vadd.f32 0.0, %v1312
      %1314 = vdwg.mxu0
      %1331 = vrot.lane.b32.xlu0 %v1115, 64
      %v1332 = vpop.permute.xlu0 %1331
      %1333 = vrot.lane.b32.xlu0 %v1116, 64
      %v1334 = vpop.permute.xlu0 %1333
      %1335 = vrot.lane.b32.xlu0 %v1117, 64
      %v1336 = vpop.permute.xlu0 %1335
      %1337 = vrot.lane.b32.xlu0 %v1118, 64
      %v1338 = vpop.permute.xlu0 %1337
      %1339 = vrot.lane.b32.xlu0 %v1119, 64
      %v1340 = vpop.permute.xlu0 %1339
      %1341 = vrot.lane.b32.xlu0 %v1120, 64
      %v1342 = vpop.permute.xlu0 %1341
      %1343 = vrot.lane.b32.xlu0 %v1121, 64
      %v1344 = vpop.permute.xlu0 %1343
      %1345 = vrot.lane.b32.xlu0 %v1122, 64
      %v1346 = vpop.permute.xlu0 %1345
      %1347 = vrot.lane.b32.xlu0 %v1123, 64
      %v1348 = vpop.permute.xlu0 %1347
      %1349 = vrot.lane.b32.xlu0 %v1124, 64
      %v1350 = vpop.permute.xlu0 %1349
      %1351 = vrot.lane.b32.xlu0 %v1125, 64
      %v1352 = vpop.permute.xlu0 %1351
      %1353 = vrot.lane.b32.xlu0 %v1126, 64
      %v1354 = vpop.permute.xlu0 %1353
      %1355 = vrot.lane.b32.xlu0 %v1127, 64
      %v1356 = vpop.permute.xlu0 %1355
      %1357 = vrot.lane.b32.xlu0 %v1128, 64
      %v1358 = vpop.permute.xlu0 %1357
      %1359 = vrot.lane.b32.xlu0 %v1129, 64
      %v1360 = vpop.permute.xlu0 %1359
      %1361 = vrot.lane.b32.xlu0 %v1130, 64
      %v1362 = vpop.permute.xlu0 %1361
      %v1379 = vadd.f32 %v1149, %v1332
      %v1380 = vadd.f32 %v1152, %v1334
      %v1381 = vadd.f32 %v1172, %v1336
      %v1382 = vadd.f32 %v1175, %v1338
      %v1383 = vadd.f32 %v1195, %v1340
      %v1384 = vadd.f32 %v1198, %v1342
      %v1385 = vadd.f32 %v1218, %v1344
      %v1386 = vadd.f32 %v1221, %v1346
      %v1387 = vadd.f32 %v1241, %v1348
      %v1388 = vadd.f32 %v1244, %v1350
      %v1389 = vadd.f32 %v1264, %v1352
      %v1390 = vadd.f32 %v1267, %v1354
      %v1391 = vadd.f32 %v1287, %v1356
      %v1392 = vadd.f32 %v1290, %v1358
      %v1393 = vadd.f32 %v1310, %v1360
      %v1394 = vadd.f32 %v1313, %v1362
      %v1395 = vld [vmem:[%s7] sm:$0xff]
      %v1396 = vld [vmem:[%s7 + $0x8] sm:$0xff]
      %v1397 = vld [vmem:[%s7 + $0x10] sm:$0xff]
      %v1398 = vld [vmem:[%s7 + $0x18] sm:$0xff]
      %v1399 = vld [vmem:[%s7 + $0x20] sm:$0xff]
      %v1400 = vld [vmem:[%s7 + $0x28] sm:$0xff]
      %v1401 = vld [vmem:[%s7 + $0x30] sm:$0xff]
      %v1402 = vld [vmem:[%s7 + $0x38] sm:$0xff]
      %v1403 = vld [vmem:[%s7 + $0x40] sm:$0xff]
      %v1404 = vld [vmem:[%s7 + $0x48] sm:$0xff]
      %v1405 = vld [vmem:[%s7 + $0x50] sm:$0xff]
      %v1406 = vld [vmem:[%s7 + $0x58] sm:$0xff]
      %v1407 = vld [vmem:[%s7 + $0x60] sm:$0xff]
      %v1408 = vld [vmem:[%s7 + $0x68] sm:$0xff]
      %v1409 = vld [vmem:[%s7 + $0x70] sm:$0xff]
      %v1410 = vld [vmem:[%s7 + $0x78] sm:$0xff]
      %v1411 = vld [vmem:[%s8] sm:$0xff]
      %v1412 = vld [vmem:[%s8 + $0x8] sm:$0xff]
      %1413 = vmatpush.msra.mxu0 0.0
      %1414 = vmatpush.msra.mxu0 0.0
      %1415 = vmatpush.msra.mxu0 0.0
      %1416 = vmatpush.msra.mxu0 0.0
      %1417 = vmatpush.msra.mxu0 0.0
      %1418 = vmatpush.msra.mxu0 0.0
      %1419 = vmatpush.msra.mxu0 0.0
      %1420 = vmatpush.msra.mxu0 0.0
      %1421 = vmatpush.msra.mxu0 0.0
      %1422 = vmatpush.msra.mxu0 0.0
      %1423 = vmatpush.msra.mxu0 0.0
      %1424 = vmatpush.msra.mxu0 0.0
      %1425 = vmatpush.msra.mxu0 0.0
      %1426 = vmatpush.msra.mxu0 0.0
      %1427 = vmatpush.msra.mxu0 0.0
      %1428 = vmatpush.msra.mxu0 %v1411
      %1429 = vmatmul.f32.gmra.mxu0 %v538
      %v1430 = vpop.f32.mrf.mxu0
      %v1431 = vadd.f32 0.0, %v1430
      %1432 = vmatmul.f32.gmra.mxu0 %v541
      %v1433 = vpop.f32.mrf.mxu0
      %v1434 = vadd.f32 0.0, %v1433
      %1435 = vmatmul.f32.gmra.mxu0 %v544
      %v1436 = vpop.f32.mrf.mxu0
      %v1437 = vadd.f32 0.0, %v1436
      %1438 = vmatmul.f32.gmra.mxu0 %v547
      %v1439 = vpop.f32.mrf.mxu0
      %v1440 = vadd.f32 0.0, %v1439
      %1441 = vmatmul.f32.gmra.mxu0 %v550
      %v1442 = vpop.f32.mrf.mxu0
      %v1443 = vadd.f32 0.0, %v1442
      %1444 = vmatmul.f32.gmra.mxu0 %v553
      %v1445 = vpop.f32.mrf.mxu0
      %v1446 = vadd.f32 0.0, %v1445
      %1447 = vmatmul.f32.gmra.mxu0 %v556
      %v1448 = vpop.f32.mrf.mxu0
      %v1449 = vadd.f32 0.0, %v1448
      %1450 = vmatmul.f32.gmra.mxu0 %v559
      %v1451 = vpop.f32.mrf.mxu0
      %v1452 = vadd.f32 0.0, %v1451
      %1453 = vmatmul.f32.gmra.mxu0 %v562
      %v1454 = vpop.f32.mrf.mxu0
      %v1455 = vadd.f32 0.0, %v1454
      %1456 = vmatmul.f32.gmra.mxu0 %v565
      %v1457 = vpop.f32.mrf.mxu0
      %v1458 = vadd.f32 0.0, %v1457
      %1459 = vmatmul.f32.gmra.mxu0 %v568
      %v1460 = vpop.f32.mrf.mxu0
      %v1461 = vadd.f32 0.0, %v1460
      %1462 = vmatmul.f32.gmra.mxu0 %v571
      %v1463 = vpop.f32.mrf.mxu0
      %v1464 = vadd.f32 0.0, %v1463
      %1465 = vmatmul.f32.gmra.mxu0 %v574
      %v1466 = vpop.f32.mrf.mxu0
      %v1467 = vadd.f32 0.0, %v1466
      %1468 = vmatmul.f32.gmra.mxu0 %v577
      %v1469 = vpop.f32.mrf.mxu0
      %v1470 = vadd.f32 0.0, %v1469
      %1471 = vmatmul.f32.gmra.mxu0 %v580
      %v1472 = vpop.f32.mrf.mxu0
      %v1473 = vadd.f32 0.0, %v1472
      %1474 = vmatmul.f32.gmra.mxu0 %v583
      %v1475 = vpop.f32.mrf.mxu0
      %v1476 = vadd.f32 0.0, %v1475
      %1477 = vdwg.mxu0
      %1478 = vmatpush.msra.mxu0 0.0
      %1479 = vmatpush.msra.mxu0 0.0
      %1480 = vmatpush.msra.mxu0 0.0
      %1481 = vmatpush.msra.mxu0 0.0
      %1482 = vmatpush.msra.mxu0 0.0
      %1483 = vmatpush.msra.mxu0 0.0
      %1484 = vmatpush.msra.mxu0 0.0
      %1485 = vmatpush.msra.mxu0 0.0
      %1486 = vmatpush.msra.mxu0 0.0
      %1487 = vmatpush.msra.mxu0 0.0
      %1488 = vmatpush.msra.mxu0 0.0
      %1489 = vmatpush.msra.mxu0 0.0
      %1490 = vmatpush.msra.mxu0 0.0
      %1491 = vmatpush.msra.mxu0 0.0
      %1492 = vmatpush.msra.mxu0 0.0
      %1493 = vmatpush.msra.mxu0 %v1412
      %1494 = vmatmul.f32.gmra.mxu0 %v538
      %v1495 = vpop.f32.mrf.mxu0
      %v1496 = vadd.f32 0.0, %v1495
      %1497 = vmatmul.f32.gmra.mxu0 %v541
      %v1498 = vpop.f32.mrf.mxu0
      %v1499 = vadd.f32 0.0, %v1498
      %1500 = vmatmul.f32.gmra.mxu0 %v544
      %v1501 = vpop.f32.mrf.mxu0
      %v1502 = vadd.f32 0.0, %v1501
      %1503 = vmatmul.f32.gmra.mxu0 %v547
      %v1504 = vpop.f32.mrf.mxu0
      %v1505 = vadd.f32 0.0, %v1504
      %1506 = vmatmul.f32.gmra.mxu0 %v550
      %v1507 = vpop.f32.mrf.mxu0
      %v1508 = vadd.f32 0.0, %v1507
      %1509 = vmatmul.f32.gmra.mxu0 %v553
      %v1510 = vpop.f32.mrf.mxu0
      %v1511 = vadd.f32 0.0, %v1510
      %1512 = vmatmul.f32.gmra.mxu0 %v556
      %v1513 = vpop.f32.mrf.mxu0
      %v1514 = vadd.f32 0.0, %v1513
      %1515 = vmatmul.f32.gmra.mxu0 %v559
      %v1516 = vpop.f32.mrf.mxu0
      %v1517 = vadd.f32 0.0, %v1516
      %1518 = vmatmul.f32.gmra.mxu0 %v562
      %v1519 = vpop.f32.mrf.mxu0
      %v1520 = vadd.f32 0.0, %v1519
      %1521 = vmatmul.f32.gmra.mxu0 %v565
      %v1522 = vpop.f32.mrf.mxu0
      %v1523 = vadd.f32 0.0, %v1522
      %1524 = vmatmul.f32.gmra.mxu0 %v568
      %v1525 = vpop.f32.mrf.mxu0
      %v1526 = vadd.f32 0.0, %v1525
      %1527 = vmatmul.f32.gmra.mxu0 %v571
      %v1528 = vpop.f32.mrf.mxu0
      %v1529 = vadd.f32 0.0, %v1528
      %1530 = vmatmul.f32.gmra.mxu0 %v574
      %v1531 = vpop.f32.mrf.mxu0
      %v1532 = vadd.f32 0.0, %v1531
      %1533 = vmatmul.f32.gmra.mxu0 %v577
      %v1534 = vpop.f32.mrf.mxu0
      %v1535 = vadd.f32 0.0, %v1534
      %1536 = vmatmul.f32.gmra.mxu0 %v580
      %v1537 = vpop.f32.mrf.mxu0
      %v1538 = vadd.f32 0.0, %v1537
      %1539 = vmatmul.f32.gmra.mxu0 %v583
      %v1540 = vpop.f32.mrf.mxu0
      %v1541 = vadd.f32 0.0, %v1540
      %1542 = vdwg.mxu0
      %vm1543 = vcmask 523264
      %v1545 = vsel %vm1543, %v1379, 0
      %v1548 = vsel %vm1543, %v1380, 0
      %v1551 = vsel %vm1543, %v1381, 0
      %v1554 = vsel %vm1543, %v1382, 0
      %v1557 = vsel %vm1543, %v1383, 0
      %v1560 = vsel %vm1543, %v1384, 0
      %v1563 = vsel %vm1543, %v1385, 0
      %v1566 = vsel %vm1543, %v1386, 0
      %v1569 = vsel %vm1543, %v1387, 0
      %v1572 = vsel %vm1543, %v1388, 0
      %v1575 = vsel %vm1543, %v1389, 0
      %v1578 = vsel %vm1543, %v1390, 0
      %v1581 = vsel %vm1543, %v1391, 0
      %v1584 = vsel %vm1543, %v1392, 0
      %v1587 = vsel %vm1543, %v1393, 0
      %v1590 = vsel %vm1543, %v1394, 0
      %1592 = vmatpush.msra.mxu0 0.0
      %1593 = vmatpush.msra.mxu0 0.0
      %1594 = vmatpush.msra.mxu0 0.0
      %1595 = vmatpush.msra.mxu0 0.0
      %1596 = vmatpush.msra.mxu0 0.0
      %1597 = vmatpush.msra.mxu0 0.0
      %1598 = vmatpush.msra.mxu0 0.0
      %1599 = vmatpush.msra.mxu0 0.0
      %1600 = vmatpush.msra.mxu0 %v1409
      %1601 = vmatpush.msra.mxu0 %v1407
      %1602 = vmatpush.msra.mxu0 %v1405
      %1603 = vmatpush.msra.mxu0 %v1403
      %1604 = vmatpush.msra.mxu0 %v1401
      %1605 = vmatpush.msra.mxu0 %v1399
      %1606 = vmatpush.msra.mxu0 %v1397
      %1607 = vmatpush.msra.mxu0 %v1395
      %1608 = vmatmul.f32.gmra.mxu0 %v1545
      %v1609 = vpop.f32.mrf.mxu0
      %v1610 = vadd.f32 %v1431, %v1609
      %1611 = vmatmul.f32.gmra.mxu0 %v1548
      %v1612 = vpop.f32.mrf.mxu0
      %v1613 = vadd.f32 %v1434, %v1612
      %1614 = vmatmul.f32.gmra.mxu0 %v1551
      %v1615 = vpop.f32.mrf.mxu0
      %v1616 = vadd.f32 %v1437, %v1615
      %1617 = vmatmul.f32.gmra.mxu0 %v1554
      %v1618 = vpop.f32.mrf.mxu0
      %v1619 = vadd.f32 %v1440, %v1618
      %1620 = vmatmul.f32.gmra.mxu0 %v1557
      %v1621 = vpop.f32.mrf.mxu0
      %v1622 = vadd.f32 %v1443, %v1621
      %1623 = vmatmul.f32.gmra.mxu0 %v1560
      %v1624 = vpop.f32.mrf.mxu0
      %v1625 = vadd.f32 %v1446, %v1624
      %1626 = vmatmul.f32.gmra.mxu0 %v1563
      %v1627 = vpop.f32.mrf.mxu0
      %v1628 = vadd.f32 %v1449, %v1627
      %1629 = vmatmul.f32.gmra.mxu0 %v1566
      %v1630 = vpop.f32.mrf.mxu0
      %v1631 = vadd.f32 %v1452, %v1630
      %1632 = vmatmul.f32.gmra.mxu0 %v1569
      %v1633 = vpop.f32.mrf.mxu0
      %v1634 = vadd.f32 %v1455, %v1633
      %1635 = vmatmul.f32.gmra.mxu0 %v1572
      %v1636 = vpop.f32.mrf.mxu0
      %v1637 = vadd.f32 %v1458, %v1636
      %1638 = vmatmul.f32.gmra.mxu0 %v1575
      %v1639 = vpop.f32.mrf.mxu0
      %v1640 = vadd.f32 %v1461, %v1639
      %1641 = vmatmul.f32.gmra.mxu0 %v1578
      %v1642 = vpop.f32.mrf.mxu0
      %v1643 = vadd.f32 %v1464, %v1642
      %1644 = vmatmul.f32.gmra.mxu0 %v1581
      %v1645 = vpop.f32.mrf.mxu0
      %v1646 = vadd.f32 %v1467, %v1645
      %1647 = vmatmul.f32.gmra.mxu0 %v1584
      %v1648 = vpop.f32.mrf.mxu0
      %v1649 = vadd.f32 %v1470, %v1648
      %1650 = vmatmul.f32.gmra.mxu0 %v1587
      %v1651 = vpop.f32.mrf.mxu0
      %v1652 = vadd.f32 %v1473, %v1651
      %1653 = vmatmul.f32.gmra.mxu0 %v1590
      %v1654 = vpop.f32.mrf.mxu0
      %v1655 = vadd.f32 %v1476, %v1654
      %1656 = vdwg.mxu0
      %1657 = vmatpush.msra.mxu0 0.0
      %1658 = vmatpush.msra.mxu0 0.0
      %1659 = vmatpush.msra.mxu0 0.0
      %1660 = vmatpush.msra.mxu0 0.0
      %1661 = vmatpush.msra.mxu0 0.0
      %1662 = vmatpush.msra.mxu0 0.0
      %1663 = vmatpush.msra.mxu0 0.0
      %1664 = vmatpush.msra.mxu0 0.0
      %1665 = vmatpush.msra.mxu0 %v1410
      %1666 = vmatpush.msra.mxu0 %v1408
      %1667 = vmatpush.msra.mxu0 %v1406
      %1668 = vmatpush.msra.mxu0 %v1404
      %1669 = vmatpush.msra.mxu0 %v1402
      %1670 = vmatpush.msra.mxu0 %v1400
      %1671 = vmatpush.msra.mxu0 %v1398
      %1672 = vmatpush.msra.mxu0 %v1396
      %1673 = vmatmul.f32.gmra.mxu0 %v1545
      %v1674 = vpop.f32.mrf.mxu0
      %v1675 = vadd.f32 %v1496, %v1674
      %1676 = vmatmul.f32.gmra.mxu0 %v1548
      %v1677 = vpop.f32.mrf.mxu0
      %v1678 = vadd.f32 %v1499, %v1677
      %1679 = vmatmul.f32.gmra.mxu0 %v1551
      %v1680 = vpop.f32.mrf.mxu0
      %v1681 = vadd.f32 %v1502, %v1680
      %1682 = vmatmul.f32.gmra.mxu0 %v1554
      %v1683 = vpop.f32.mrf.mxu0
      %v1684 = vadd.f32 %v1505, %v1683
      %1685 = vmatmul.f32.gmra.mxu0 %v1557
      %v1686 = vpop.f32.mrf.mxu0
      %v1687 = vadd.f32 %v1508, %v1686
      %1688 = vmatmul.f32.gmra.mxu0 %v1560
      %v1689 = vpop.f32.mrf.mxu0
      %v1690 = vadd.f32 %v1511, %v1689
      %1691 = vmatmul.f32.gmra.mxu0 %v1563
      %v1692 = vpop.f32.mrf.mxu0
      %v1693 = vadd.f32 %v1514, %v1692
      %1694 = vmatmul.f32.gmra.mxu0 %v1566
      %v1695 = vpop.f32.mrf.mxu0
      %v1696 = vadd.f32 %v1517, %v1695
      %1697 = vmatmul.f32.gmra.mxu0 %v1569
      %v1698 = vpop.f32.mrf.mxu0
      %v1699 = vadd.f32 %v1520, %v1698
      %1700 = vmatmul.f32.gmra.mxu0 %v1572
      %v1701 = vpop.f32.mrf.mxu0
      %v1702 = vadd.f32 %v1523, %v1701
      %1703 = vmatmul.f32.gmra.mxu0 %v1575
      %v1704 = vpop.f32.mrf.mxu0
      %v1705 = vadd.f32 %v1526, %v1704
      %1706 = vmatmul.f32.gmra.mxu0 %v1578
      %v1707 = vpop.f32.mrf.mxu0
      %v1708 = vadd.f32 %v1529, %v1707
      %1709 = vmatmul.f32.gmra.mxu0 %v1581
      %v1710 = vpop.f32.mrf.mxu0
      %v1711 = vadd.f32 %v1532, %v1710
      %1712 = vmatmul.f32.gmra.mxu0 %v1584
      %v1713 = vpop.f32.mrf.mxu0
      %v1714 = vadd.f32 %v1535, %v1713
      %1715 = vmatmul.f32.gmra.mxu0 %v1587
      %v1716 = vpop.f32.mrf.mxu0
      %v1717 = vadd.f32 %v1538, %v1716
      %1718 = vmatmul.f32.gmra.mxu0 %v1590
      %v1719 = vpop.f32.mrf.mxu0
      %v1720 = vadd.f32 %v1541, %v1719
      %1721 = vdwg.mxu0
      %v1722 = vld [vmem:[%s9] sm:$0x3]
      %v1724 = vperm.slane %v1722, 0
      %v1725 = vperm.slane %v1722, 1
      %v1728 = vadd.f32 %v1610, %v1724
      %v1729 = vadd.f32 %v1675, %v1725
      %v1730 = vadd.f32 %v1613, %v1724
      %v1731 = vadd.f32 %v1678, %v1725
      %v1732 = vadd.f32 %v1616, %v1724
      %v1733 = vadd.f32 %v1681, %v1725
      %v1734 = vadd.f32 %v1619, %v1724
      %v1735 = vadd.f32 %v1684, %v1725
      %v1736 = vadd.f32 %v1622, %v1724
      %v1737 = vadd.f32 %v1687, %v1725
      %v1738 = vadd.f32 %v1625, %v1724
      %v1739 = vadd.f32 %v1690, %v1725
      %v1740 = vadd.f32 %v1628, %v1724
      %v1741 = vadd.f32 %v1693, %v1725
      %v1742 = vadd.f32 %v1631, %v1724
      %v1743 = vadd.f32 %v1696, %v1725
      %v1744 = vadd.f32 %v1634, %v1724
      %v1745 = vadd.f32 %v1699, %v1725
      %v1746 = vadd.f32 %v1637, %v1724
      %v1747 = vadd.f32 %v1702, %v1725
      %v1748 = vadd.f32 %v1640, %v1724
      %v1749 = vadd.f32 %v1705, %v1725
      %v1750 = vadd.f32 %v1643, %v1724
      %v1751 = vadd.f32 %v1708, %v1725
      %v1752 = vadd.f32 %v1646, %v1724
      %v1753 = vadd.f32 %v1711, %v1725
      %v1754 = vadd.f32 %v1649, %v1724
      %v1755 = vadd.f32 %v1714, %v1725
      %v1756 = vadd.f32 %v1652, %v1724
      %v1757 = vadd.f32 %v1717, %v1725
      %v1758 = vadd.f32 %v1655, %v1724
      %v1759 = vadd.f32 %v1720, %v1725
      %v1760 = vxor.u32 %v1728, 2147483648
      %v1761 = vxor.u32 %v1730, 2147483648
      %v1762 = vxor.u32 %v1732, 2147483648
      %v1763 = vxor.u32 %v1734, 2147483648
      %v1764 = vxor.u32 %v1736, 2147483648
      %v1765 = vxor.u32 %v1738, 2147483648
      %v1766 = vxor.u32 %v1740, 2147483648
      %v1767 = vxor.u32 %v1742, 2147483648
      %v1768 = vxor.u32 %v1744, 2147483648
      %v1769 = vxor.u32 %v1746, 2147483648
      %v1770 = vxor.u32 %v1748, 2147483648
      %v1771 = vxor.u32 %v1750, 2147483648
      %v1772 = vxor.u32 %v1752, 2147483648
      %v1773 = vxor.u32 %v1754, 2147483648
      %v1774 = vxor.u32 %v1756, 2147483648
      %v1775 = vxor.u32 %v1758, 2147483648
      %v1776 = vmul.f32 %v1760, 1.442695
      %v1777 = vpow.pop %v1776
      %v1778 = vmul.f32 %v1761, 1.442695
      %v1779 = vpow.pop %v1778
      %v1780 = vmul.f32 %v1762, 1.442695
      %v1781 = vpow.pop %v1780
      %v1782 = vmul.f32 %v1763, 1.442695
      %v1783 = vpow.pop %v1782
      %v1784 = vmul.f32 %v1764, 1.442695
      %v1785 = vpow.pop %v1784
      %v1786 = vmul.f32 %v1765, 1.442695
      %v1787 = vpow.pop %v1786
      %v1788 = vmul.f32 %v1766, 1.442695
      %v1789 = vpow.pop %v1788
      %v1790 = vmul.f32 %v1767, 1.442695
      %v1791 = vpow.pop %v1790
      %v1792 = vmul.f32 %v1768, 1.442695
      %v1793 = vpow.pop %v1792
      %v1794 = vmul.f32 %v1769, 1.442695
      %v1795 = vpow.pop %v1794
      %v1796 = vmul.f32 %v1770, 1.442695
      %v1797 = vpow.pop %v1796
      %v1798 = vmul.f32 %v1771, 1.442695
      %v1799 = vpow.pop %v1798
      %v1800 = vmul.f32 %v1772, 1.442695
      %v1801 = vpow.pop %v1800
      %v1802 = vmul.f32 %v1773, 1.442695
      %v1803 = vpow.pop %v1802
      %v1804 = vmul.f32 %v1774, 1.442695
      %v1805 = vpow.pop %v1804
      %v1806 = vmul.f32 %v1775, 1.442695
      %v1807 = vpow.pop %v1806
      %v1808 = vadd.f32 %v1777, 1.0
      %v1809 = vadd.f32 %v1779, 1.0
      %v1810 = vadd.f32 %v1781, 1.0
      %v1811 = vadd.f32 %v1783, 1.0
      %v1812 = vadd.f32 %v1785, 1.0
      %v1813 = vadd.f32 %v1787, 1.0
      %v1814 = vadd.f32 %v1789, 1.0
      %v1815 = vadd.f32 %v1791, 1.0
      %v1816 = vadd.f32 %v1793, 1.0
      %v1817 = vadd.f32 %v1795, 1.0
      %v1818 = vadd.f32 %v1797, 1.0
      %v1819 = vadd.f32 %v1799, 1.0
      %v1820 = vadd.f32 %v1801, 1.0
      %v1821 = vadd.f32 %v1803, 1.0
      %v1822 = vadd.f32 %v1805, 1.0
      %v1823 = vadd.f32 %v1807, 1.0
      %v1824 = vrcp.pop %v1808
      %v1825 = vmul.f32 %v1808, %v1824
      %v1826 = vsub.f32 1.0, %v1825
      %v1827 = vmul.f32 %v1824, %v1826
      %v1828 = vadd.f32 %v1824, %v1827
      %vm1829 = vweird.f32 %v1808
      %vm1830 = vweird.f32 %v1824
      %vm1831 = vmor %vm1829, %vm1830
      %v1832 = vsel %vm1831, %v1824, %v1828
      %v1833 = vand.u32 2147483647, %v1808
      %vm1834 = vcmp.eq.f32.partialorder %v1833, 8.507059e+37
      %v1835 = vand.u32 %v1808, 2147483648
      %v1836 = vor.u32 1.1754944e-38, %v1835
      %v1837 = vsel %vm1834, %v1836, %v1832
      %v1838 = vmul.f32 1.0, %v1837
      %v1839 = vrcp.pop %v1809
      %v1840 = vmul.f32 %v1809, %v1839
      %v1841 = vsub.f32 1.0, %v1840
      %v1842 = vmul.f32 %v1839, %v1841
      %v1843 = vadd.f32 %v1839, %v1842
      %vm1844 = vweird.f32 %v1809
      %vm1845 = vweird.f32 %v1839
      %vm1846 = vmor %vm1844, %vm1845
      %v1847 = vsel %vm1846, %v1839, %v1843
      %v1848 = vand.u32 2147483647, %v1809
      %vm1849 = vcmp.eq.f32.partialorder %v1848, 8.507059e+37
      %v1850 = vand.u32 %v1809, 2147483648
      %v1851 = vor.u32 1.1754944e-38, %v1850
      %v1852 = vsel %vm1849, %v1851, %v1847
      %v1853 = vmul.f32 1.0, %v1852
      %v1854 = vrcp.pop %v1810
      %v1855 = vmul.f32 %v1810, %v1854
      %v1856 = vsub.f32 1.0, %v1855
      %v1857 = vmul.f32 %v1854, %v1856
      %v1858 = vadd.f32 %v1854, %v1857
      %vm1859 = vweird.f32 %v1810
      %vm1860 = vweird.f32 %v1854
      %vm1861 = vmor %vm1859, %vm1860
      %v1862 = vsel %vm1861, %v1854, %v1858
      %v1863 = vand.u32 2147483647, %v1810
      %vm1864 = vcmp.eq.f32.partialorder %v1863, 8.507059e+37
      %v1865 = vand.u32 %v1810, 2147483648
      %v1866 = vor.u32 1.1754944e-38, %v1865
      %v1867 = vsel %vm1864, %v1866, %v1862
      %v1868 = vmul.f32 1.0, %v1867
      %v1869 = vrcp.pop %v1811
      %v1870 = vmul.f32 %v1811, %v1869
      %v1871 = vsub.f32 1.0, %v1870
      %v1872 = vmul.f32 %v1869, %v1871
      %v1873 = vadd.f32 %v1869, %v1872
      %vm1874 = vweird.f32 %v1811
      %vm1875 = vweird.f32 %v1869
      %vm1876 = vmor %vm1874, %vm1875
      %v1877 = vsel %vm1876, %v1869, %v1873
      %v1878 = vand.u32 2147483647, %v1811
      %vm1879 = vcmp.eq.f32.partialorder %v1878, 8.507059e+37
      %v1880 = vand.u32 %v1811, 2147483648
      %v1881 = vor.u32 1.1754944e-38, %v1880
      %v1882 = vsel %vm1879, %v1881, %v1877
      %v1883 = vmul.f32 1.0, %v1882
      %v1884 = vrcp.pop %v1812
      %v1885 = vmul.f32 %v1812, %v1884
      %v1886 = vsub.f32 1.0, %v1885
      %v1887 = vmul.f32 %v1884, %v1886
      %v1888 = vadd.f32 %v1884, %v1887
      %vm1889 = vweird.f32 %v1812
      %vm1890 = vweird.f32 %v1884
      %vm1891 = vmor %vm1889, %vm1890
      %v1892 = vsel %vm1891, %v1884, %v1888
      %v1893 = vand.u32 2147483647, %v1812
      %vm1894 = vcmp.eq.f32.partialorder %v1893, 8.507059e+37
      %v1895 = vand.u32 %v1812, 2147483648
      %v1896 = vor.u32 1.1754944e-38, %v1895
      %v1897 = vsel %vm1894, %v1896, %v1892
      %v1898 = vmul.f32 1.0, %v1897
      %v1899 = vrcp.pop %v1813
      %v1900 = vmul.f32 %v1813, %v1899
      %v1901 = vsub.f32 1.0, %v1900
      %v1902 = vmul.f32 %v1899, %v1901
      %v1903 = vadd.f32 %v1899, %v1902
      %vm1904 = vweird.f32 %v1813
      %vm1905 = vweird.f32 %v1899
      %vm1906 = vmor %vm1904, %vm1905
      %v1907 = vsel %vm1906, %v1899, %v1903
      %v1908 = vand.u32 2147483647, %v1813
      %vm1909 = vcmp.eq.f32.partialorder %v1908, 8.507059e+37
      %v1910 = vand.u32 %v1813, 2147483648
      %v1911 = vor.u32 1.1754944e-38, %v1910
      %v1912 = vsel %vm1909, %v1911, %v1907
      %v1913 = vmul.f32 1.0, %v1912
      %v1914 = vrcp.pop %v1814
      %v1915 = vmul.f32 %v1814, %v1914
      %v1916 = vsub.f32 1.0, %v1915
      %v1917 = vmul.f32 %v1914, %v1916
      %v1918 = vadd.f32 %v1914, %v1917
      %vm1919 = vweird.f32 %v1814
      %vm1920 = vweird.f32 %v1914
      %vm1921 = vmor %vm1919, %vm1920
      %v1922 = vsel %vm1921, %v1914, %v1918
      %v1923 = vand.u32 2147483647, %v1814
      %vm1924 = vcmp.eq.f32.partialorder %v1923, 8.507059e+37
      %v1925 = vand.u32 %v1814, 2147483648
      %v1926 = vor.u32 1.1754944e-38, %v1925
      %v1927 = vsel %vm1924, %v1926, %v1922
      %v1928 = vmul.f32 1.0, %v1927
      %v1929 = vrcp.pop %v1815
      %v1930 = vmul.f32 %v1815, %v1929
      %v1931 = vsub.f32 1.0, %v1930
      %v1932 = vmul.f32 %v1929, %v1931
      %v1933 = vadd.f32 %v1929, %v1932
      %vm1934 = vweird.f32 %v1815
      %vm1935 = vweird.f32 %v1929
      %vm1936 = vmor %vm1934, %vm1935
      %v1937 = vsel %vm1936, %v1929, %v1933
      %v1938 = vand.u32 2147483647, %v1815
      %vm1939 = vcmp.eq.f32.partialorder %v1938, 8.507059e+37
      %v1940 = vand.u32 %v1815, 2147483648
      %v1941 = vor.u32 1.1754944e-38, %v1940
      %v1942 = vsel %vm1939, %v1941, %v1937
      %v1943 = vmul.f32 1.0, %v1942
      %v1944 = vrcp.pop %v1816
      %v1945 = vmul.f32 %v1816, %v1944
      %v1946 = vsub.f32 1.0, %v1945
      %v1947 = vmul.f32 %v1944, %v1946
      %v1948 = vadd.f32 %v1944, %v1947
      %vm1949 = vweird.f32 %v1816
      %vm1950 = vweird.f32 %v1944
      %vm1951 = vmor %vm1949, %vm1950
      %v1952 = vsel %vm1951, %v1944, %v1948
      %v1953 = vand.u32 2147483647, %v1816
      %vm1954 = vcmp.eq.f32.partialorder %v1953, 8.507059e+37
      %v1955 = vand.u32 %v1816, 2147483648
      %v1956 = vor.u32 1.1754944e-38, %v1955
      %v1957 = vsel %vm1954, %v1956, %v1952
      %v1958 = vmul.f32 1.0, %v1957
      %v1959 = vrcp.pop %v1817
      %v1960 = vmul.f32 %v1817, %v1959
      %v1961 = vsub.f32 1.0, %v1960
      %v1962 = vmul.f32 %v1959, %v1961
      %v1963 = vadd.f32 %v1959, %v1962
      %vm1964 = vweird.f32 %v1817
      %vm1965 = vweird.f32 %v1959
      %vm1966 = vmor %vm1964, %vm1965
      %v1967 = vsel %vm1966, %v1959, %v1963
      %v1968 = vand.u32 2147483647, %v1817
      %vm1969 = vcmp.eq.f32.partialorder %v1968, 8.507059e+37
      %v1970 = vand.u32 %v1817, 2147483648
      %v1971 = vor.u32 1.1754944e-38, %v1970
      %v1972 = vsel %vm1969, %v1971, %v1967
      %v1973 = vmul.f32 1.0, %v1972
      %v1974 = vrcp.pop %v1818
      %v1975 = vmul.f32 %v1818, %v1974
      %v1976 = vsub.f32 1.0, %v1975
      %v1977 = vmul.f32 %v1974, %v1976
      %v1978 = vadd.f32 %v1974, %v1977
      %vm1979 = vweird.f32 %v1818
      %vm1980 = vweird.f32 %v1974
      %vm1981 = vmor %vm1979, %vm1980
      %v1982 = vsel %vm1981, %v1974, %v1978
      %v1983 = vand.u32 2147483647, %v1818
      %vm1984 = vcmp.eq.f32.partialorder %v1983, 8.507059e+37
      %v1985 = vand.u32 %v1818, 2147483648
      %v1986 = vor.u32 1.1754944e-38, %v1985
      %v1987 = vsel %vm1984, %v1986, %v1982
      %v1988 = vmul.f32 1.0, %v1987
      %v1989 = vrcp.pop %v1819
      %v1990 = vmul.f32 %v1819, %v1989
      %v1991 = vsub.f32 1.0, %v1990
      %v1992 = vmul.f32 %v1989, %v1991
      %v1993 = vadd.f32 %v1989, %v1992
      %vm1994 = vweird.f32 %v1819
      %vm1995 = vweird.f32 %v1989
      %vm1996 = vmor %vm1994, %vm1995
      %v1997 = vsel %vm1996, %v1989, %v1993
      %v1998 = vand.u32 2147483647, %v1819
      %vm1999 = vcmp.eq.f32.partialorder %v1998, 8.507059e+37
      %v2000 = vand.u32 %v1819, 2147483648
      %v2001 = vor.u32 1.1754944e-38, %v2000
      %v2002 = vsel %vm1999, %v2001, %v1997
      %v2003 = vmul.f32 1.0, %v2002
      %v2004 = vrcp.pop %v1820
      %v2005 = vmul.f32 %v1820, %v2004
      %v2006 = vsub.f32 1.0, %v2005
      %v2007 = vmul.f32 %v2004, %v2006
      %v2008 = vadd.f32 %v2004, %v2007
      %vm2009 = vweird.f32 %v1820
      %vm2010 = vweird.f32 %v2004
      %vm2011 = vmor %vm2009, %vm2010
      %v2012 = vsel %vm2011, %v2004, %v2008
      %v2013 = vand.u32 2147483647, %v1820
      %vm2014 = vcmp.eq.f32.partialorder %v2013, 8.507059e+37
      %v2015 = vand.u32 %v1820, 2147483648
      %v2016 = vor.u32 1.1754944e-38, %v2015
      %v2017 = vsel %vm2014, %v2016, %v2012
      %v2018 = vmul.f32 1.0, %v2017
      %v2019 = vrcp.pop %v1821
      %v2020 = vmul.f32 %v1821, %v2019
      %v2021 = vsub.f32 1.0, %v2020
      %v2022 = vmul.f32 %v2019, %v2021
      %v2023 = vadd.f32 %v2019, %v2022
      %vm2024 = vweird.f32 %v1821
      %vm2025 = vweird.f32 %v2019
      %vm2026 = vmor %vm2024, %vm2025
      %v2027 = vsel %vm2026, %v2019, %v2023
      %v2028 = vand.u32 2147483647, %v1821
      %vm2029 = vcmp.eq.f32.partialorder %v2028, 8.507059e+37
      %v2030 = vand.u32 %v1821, 2147483648
      %v2031 = vor.u32 1.1754944e-38, %v2030
      %v2032 = vsel %vm2029, %v2031, %v2027
      %v2033 = vmul.f32 1.0, %v2032
      %v2034 = vrcp.pop %v1822
      %v2035 = vmul.f32 %v1822, %v2034
      %v2036 = vsub.f32 1.0, %v2035
      %v2037 = vmul.f32 %v2034, %v2036
      %v2038 = vadd.f32 %v2034, %v2037
      %vm2039 = vweird.f32 %v1822
      %vm2040 = vweird.f32 %v2034
      %vm2041 = vmor %vm2039, %vm2040
      %v2042 = vsel %vm2041, %v2034, %v2038
      %v2043 = vand.u32 2147483647, %v1822
      %vm2044 = vcmp.eq.f32.partialorder %v2043, 8.507059e+37
      %v2045 = vand.u32 %v1822, 2147483648
      %v2046 = vor.u32 1.1754944e-38, %v2045
      %v2047 = vsel %vm2044, %v2046, %v2042
      %v2048 = vmul.f32 1.0, %v2047
      %v2049 = vrcp.pop %v1823
      %v2050 = vmul.f32 %v1823, %v2049
      %v2051 = vsub.f32 1.0, %v2050
      %v2052 = vmul.f32 %v2049, %v2051
      %v2053 = vadd.f32 %v2049, %v2052
      %vm2054 = vweird.f32 %v1823
      %vm2055 = vweird.f32 %v2049
      %vm2056 = vmor %vm2054, %vm2055
      %v2057 = vsel %vm2056, %v2049, %v2053
      %v2058 = vand.u32 2147483647, %v1823
      %vm2059 = vcmp.eq.f32.partialorder %v2058, 8.507059e+37
      %v2060 = vand.u32 %v1823, 2147483648
      %v2061 = vor.u32 1.1754944e-38, %v2060
      %v2062 = vsel %vm2059, %v2061, %v2057
      %v2063 = vmul.f32 1.0, %v2062
      %v2064 = vtanh.pop %v1729
      %v2065 = vtanh.pop %v1731
      %v2066 = vtanh.pop %v1733
      %v2067 = vtanh.pop %v1735
      %v2068 = vtanh.pop %v1737
      %v2069 = vtanh.pop %v1739
      %v2070 = vtanh.pop %v1741
      %v2071 = vtanh.pop %v1743
      %v2072 = vtanh.pop %v1745
      %v2073 = vtanh.pop %v1747
      %v2074 = vtanh.pop %v1749
      %v2075 = vtanh.pop %v1751
      %v2076 = vtanh.pop %v1753
      %v2077 = vtanh.pop %v1755
      %v2078 = vtanh.pop %v1757
      %v2079 = vtanh.pop %v1759
      %v2080 = vmul.f32 %v1838, %v2064
      %v2081 = vmul.f32 %v1853, %v2065
      %v2082 = vmul.f32 %v1868, %v2066
      %v2083 = vmul.f32 %v1883, %v2067
      %v2084 = vmul.f32 %v1898, %v2068
      %v2085 = vmul.f32 %v1913, %v2069
      %v2086 = vmul.f32 %v1928, %v2070
      %v2087 = vmul.f32 %v1943, %v2071
      %v2088 = vmul.f32 %v1958, %v2072
      %v2089 = vmul.f32 %v1973, %v2073
      %v2090 = vmul.f32 %v1988, %v2074
      %v2091 = vmul.f32 %v2003, %v2075
      %v2092 = vmul.f32 %v2018, %v2076
      %v2093 = vmul.f32 %v2033, %v2077
      %v2094 = vmul.f32 %v2048, %v2078
      %v2095 = vmul.f32 %v2063, %v2079
      %v2096 = vadd.f32 %v2080, %v2081
      %v2097 = vrot.slane %v2096, 4
      %v2098 = vadd.f32 %v2096, %v2097
      %v2099 = vrot.slane %v2098, 2
      %v2100 = vadd.f32 %v2098, %v2099
      %v2101 = vrot.slane %v2100, 1
      %v2102 = vadd.f32 %v2100, %v2101
      %v2103 = vadd.f32 %v2082, %v2083
      %v2104 = vrot.slane %v2103, 4
      %v2105 = vadd.f32 %v2103, %v2104
      %v2106 = vrot.slane %v2105, 2
      %v2107 = vadd.f32 %v2105, %v2106
      %v2108 = vrot.slane %v2107, 1
      %v2109 = vadd.f32 %v2107, %v2108
      %v2110 = vadd.f32 %v2084, %v2085
      %v2111 = vrot.slane %v2110, 4
      %v2112 = vadd.f32 %v2110, %v2111
      %v2113 = vrot.slane %v2112, 2
      %v2114 = vadd.f32 %v2112, %v2113
      %v2115 = vrot.slane %v2114, 1
      %v2116 = vadd.f32 %v2114, %v2115
      %v2117 = vadd.f32 %v2086, %v2087
      %v2118 = vrot.slane %v2117, 4
      %v2119 = vadd.f32 %v2117, %v2118
      %v2120 = vrot.slane %v2119, 2
      %v2121 = vadd.f32 %v2119, %v2120
      %v2122 = vrot.slane %v2121, 1
      %v2123 = vadd.f32 %v2121, %v2122
      %v2124 = vadd.f32 %v2088, %v2089
      %v2125 = vrot.slane %v2124, 4
      %v2126 = vadd.f32 %v2124, %v2125
      %v2127 = vrot.slane %v2126, 2
      %v2128 = vadd.f32 %v2126, %v2127
      %v2129 = vrot.slane %v2128, 1
      %v2130 = vadd.f32 %v2128, %v2129
      %v2131 = vadd.f32 %v2090, %v2091
      %v2132 = vrot.slane %v2131, 4
      %v2133 = vadd.f32 %v2131, %v2132
      %v2134 = vrot.slane %v2133, 2
      %v2135 = vadd.f32 %v2133, %v2134
      %v2136 = vrot.slane %v2135, 1
      %v2137 = vadd.f32 %v2135, %v2136
      %v2138 = vadd.f32 %v2092, %v2093
      %v2139 = vrot.slane %v2138, 4
      %v2140 = vadd.f32 %v2138, %v2139
      %v2141 = vrot.slane %v2140, 2
      %v2142 = vadd.f32 %v2140, %v2141
      %v2143 = vrot.slane %v2142, 1
      %v2144 = vadd.f32 %v2142, %v2143
      %v2145 = vadd.f32 %v2094, %v2095
      %v2146 = vrot.slane %v2145, 4
      %v2147 = vadd.f32 %v2145, %v2146
      %v2148 = vrot.slane %v2147, 2
      %v2149 = vadd.f32 %v2147, %v2148
      %v2150 = vrot.slane %v2149, 1
      %v2151 = vadd.f32 %v2149, %v2150
      %v2152 = vtanh.pop %v2102
      %v2153 = vtanh.pop %v2109
      %v2154 = vtanh.pop %v2116
      %v2155 = vtanh.pop %v2123
      %v2156 = vtanh.pop %v2130
      %v2157 = vtanh.pop %v2137
      %v2158 = vtanh.pop %v2144
      %v2159 = vtanh.pop %v2151
      %v2160 = vld [vmem:[%s10] sm:$0xff]
      %v2161 = vld [vmem:[%s10 + $0x8] sm:$0xff]
      %v2162 = vld [vmem:[%s10 + $0x10] sm:$0xff]
      %v2163 = vld [vmem:[%s10 + $0x18] sm:$0xff]
      %v2164 = vld [vmem:[%s10 + $0x20] sm:$0xff]
      %v2165 = vld [vmem:[%s10 + $0x28] sm:$0xff]
      %v2166 = vld [vmem:[%s10 + $0x30] sm:$0xff]
      %v2167 = vld [vmem:[%s10 + $0x38] sm:$0xff]
      %v2168 = vld [vmem:[%s10 + $0x40] sm:$0xff]
      %v2169 = vld [vmem:[%s10 + $0x48] sm:$0xff]
      %v2170 = vld [vmem:[%s10 + $0x50] sm:$0xff]
      %v2171 = vld [vmem:[%s10 + $0x58] sm:$0xff]
      %v2172 = vld [vmem:[%s10 + $0x60] sm:$0xff]
      %v2173 = vld [vmem:[%s10 + $0x68] sm:$0xff]
      %v2174 = vld [vmem:[%s10 + $0x70] sm:$0xff]
      %v2175 = vld [vmem:[%s10 + $0x78] sm:$0xff]
      %v2176 = vld [vmem:[%s11] sm:$0x1]
      %v2178 = vperm.slane %v2176, 0
      %vm2188 = vcmask 1041409
      %v2189 = vsel %vm2188, %v2153, %v2152
      %vm2190 = vcmask 1042434
      %v2191 = vsel %vm2190, %v2154, %v2189
      %vm2192 = vcmask 1043459
      %v2193 = vsel %vm2192, %v2155, %v2191
      %vm2194 = vcmask 1044484
      %v2195 = vsel %vm2194, %v2156, %v2193
      %vm2196 = vcmask 1045509
      %v2197 = vsel %vm2196, %v2157, %v2195
      %vm2198 = vcmask 1046534
      %v2199 = vsel %vm2198, %v2158, %v2197
      %vm2200 = vcmask 1047559
      %v2201 = vsel %vm2200, %v2159, %v2199
      %2203 = vmatpush.msra.mxu0 %v2175
      %2204 = vmatpush.msra.mxu0 %v2174
      %2205 = vmatpush.msra.mxu0 %v2173
      %2206 = vmatpush.msra.mxu0 %v2172
      %2207 = vmatpush.msra.mxu0 %v2171
      %2208 = vmatpush.msra.mxu0 %v2170
      %2209 = vmatpush.msra.mxu0 %v2169
      %2210 = vmatpush.msra.mxu0 %v2168
      %2211 = vmatpush.msra.mxu0 %v2167
      %2212 = vmatpush.msra.mxu0 %v2166
      %2213 = vmatpush.msra.mxu0 %v2165
      %2214 = vmatpush.msra.mxu0 %v2164
      %2215 = vmatpush.msra.mxu0 %v2163
      %2216 = vmatpush.msra.mxu0 %v2162
      %2217 = vmatpush.msra.mxu0 %v2161
      %2218 = vmatpush.msra.mxu0 %v2160
      %2219 = vmatmul.f32.gmra.mxu0 %v2201
      %v2220 = vpop.f32.mrf.mxu0
      %v2221 = vadd.f32 %v2178, %v2220
      %2222 = vdwg.mxu0
      %v2223 = vtanh.pop %v2221
      %v2224 = vld [vmem:[%s12] sm:$0x1]
      %v2225 = vld [vmem:[#allocation2] sm:$0x1]
      %2227 = vset.pattern.permute.xlu0 0
      %2228 = vperm.xlu0 %2227, %v2225
      %v2229 = vpop.permute.xlu0 %2228
      %v2231 = vperm.slane %v2229, 0
      %v2233 = vsel %vm1543, %v2224, 0
      %v2236 = vsel %vm1543, %v2223, 0
      %2238 = vmatpush.xpose.msra.mxu0 0.0
      %2239 = vmatpush.xpose.msra.mxu0 0.0
      %2240 = vmatpush.xpose.msra.mxu0 0.0
      %2241 = vmatpush.xpose.msra.mxu0 0.0
      %2242 = vmatpush.xpose.msra.mxu0 0.0
      %2243 = vmatpush.xpose.msra.mxu0 0.0
      %2244 = vmatpush.xpose.msra.mxu0 0.0
      %2245 = vmatpush.xpose.msra.mxu0 0.0
      %2246 = vmatpush.xpose.msra.mxu0 0.0
      %2247 = vmatpush.xpose.msra.mxu0 0.0
      %2248 = vmatpush.xpose.msra.mxu0 0.0
      %2249 = vmatpush.xpose.msra.mxu0 0.0
      %2250 = vmatpush.xpose.msra.mxu0 0.0
      %2251 = vmatpush.xpose.msra.mxu0 0.0
      %2252 = vmatpush.xpose.msra.mxu0 0.0
      %2253 = vmatpush.xpose.msra.mxu0 %v2236
      %2254 = vmatmul.f32.gmra.mxu0 %v2233
      %v2255 = vpop.f32.mrf.mxu0
      %v2256 = vadd.f32 %v2231, %v2255
      %2257 = vdwg.mxu0
      %vm2258 = vcmask 57344
      %2259 = vst.msk [vmem:[%s495] sm:$0x1] %vm2258, %v2256
      %p2260 = scmp.lt.s32.totalorder %s27, 1
      %s2261 = scalar_select %p2260, %s27, 1
      %s2262 = scalar_lea.vmem %s14, %s2261
      // Predicated region
      $region77: #{molgan_discriminator.1} parent=75 // pred_check
        %p2263 = pneg %p349
      $region78: #{molgan_discriminator.1} parent=75 // pred_check_branch
        %2265 = sbr.rel (%p2263) target = $region80
      $region79: #{molgan_discriminator.1} parent=75 // pred_region
        _
      $region80: #{molgan_discriminator.1} parent=75 // pred_fallthru
        _
    $region76: #{molgan_discriminator.1} parent=5 // pred_fallthru
      _
    %p2266 = scmp.le.s32.totalorder 2, %s22
    // Predicated region
    $region81: #{molgan_discriminator.1} parent=5 // pred_check
      %p2267 = pneg %p2266
    $region82: #{molgan_discriminator.1} parent=5 // pred_check_branch
      %2269 = sbr.rel (%p2267) target = $region84
    $region83: #{molgan_discriminator.1} parent=5 // pred_region
      %s2270 = ssub.s32 %s22, 2
      // Predicated region
      $region85: #{molgan_discriminator.1} parent=83 // pred_check
        %p2271 = pneg %p355
      $region86: #{molgan_discriminator.1} parent=83 // pred_check_branch
        %2273 = sbr.rel (%p2271) target = $region88
      $region87: #{molgan_discriminator.1} parent=83 // pred_region
        %p2274 = scmp.lt.s32.totalorder %s28, 1
        %s2275 = scalar_select %p2274, %s28, 1
        %s2276 = scalar_lea.vmem %s14, %s2275
      $region88: #{molgan_discriminator.1} parent=83 // pred_fallthru
        _
    $region84: #{molgan_discriminator.1} parent=5 // pred_fallthru
      _
  $region6: #{molgan_discriminator.1} parent=0 // loop_footer
    %s26 = sadd.s32 1, %s22
  $region7: #{molgan_discriminator.1} parent=0 // loop_footer_branch
    %21 = sbr.rel target = $region3
  $region8: #{molgan_discriminator.1} parent=0 // loop_exit
    _

</llo_original>
